<compile_context>
chip_gen: v7x
topology: tpu7x:2x2x1
jax: 0.10.0
libtpu: 0.0.40
codegen_flags: <defaults>
</compile_context>

<pallas_src>
import jax
import jax.numpy as jnp
from jax import lax
from jax.experimental import pallas as pl
from jax.experimental.pallas import tpu as pltpu

THETA = 0.7
LRELU_SLOPE = 0.1


def _tap_offsets(W):
    # Flat-lane offset of 3x3 tap k = kh*3 + kw (stride 1, padding 1).
    return [(kh - 1) * W + (kw - 1) for kh in range(3) for kw in range(3)]


def _make_net_kernel(N, H, W, NF, CD_OUT):
    HW = H * W
    L_ALL = N * HW            # all N frames, lane-stacked
    L_T = (N - 1) * HW        # frames 0..N-2, lane-stacked
    offs = _tap_offsets(W)

    def kernel(x_ref, wcd_ref, wt_ref, wc_ref, mask_ref, prm_ref, o_ref):
        # x_ref   : (1, 1, N*HW)   all frames of one batch element, lane-stacked
        # wcd_ref : (CD_OUT, 9)    folded Conv2d_cd taps (k = kh*3 + kw)
        # wt_ref  : (18, NF)       TA conv weights, 't' half, row = 2*tap + out_ch
        # wc_ref  : (18, NF)       TA conv weights, 'c' (reference-frame) half
        # mask_ref: (9, N*HW)      per-tap validity mask, tiled over frames
        # prm_ref : (NF, 4)        packed [cd_bias | v_t | v_c | ta_bias]
        # o_ref   : (1, N*NF, HW)  buffer2 of this batch element (lane-dense)
        x = x_ref[0]                                    # (1, N*HW)
        wcd = wcd_ref[...]                              # (CD_OUT, 9)
        wt = wt_ref[...]                                # (18, NF)
        wc = wc_ref[...]                                # (18, NF)
        bcd = prm_ref[0:CD_OUT, 0:1]                    # (CD_OUT, 1)
        vt = prm_ref[:, 1:2]                            # (NF, 1)
        vc = prm_ref[:, 2:3]                            # (NF, 1)
        bta = prm_ref[0:2, 3:4]                         # (2, 1)

        # ---- folded Conv2d_cd (+ LeakyReLU), all N frames in one stacked pass.
        #      Cin == 1 -> 9 full-width VPU broadcast FMAs, no matmul needed.
        #      Roll wraps (frame seams / array ends) land only on masked lanes.
        acc = jnp.zeros((CD_OUT, L_ALL), jnp.float32)
        for k in range(9):
            off = offs[k]
            if off == 0:
                tap = x
            else:
                tap = (pltpu.roll(x, shift=(-off) % L_ALL, axis=1)
                       * mask_ref[k:k + 1, :])
            acc = acc + wcd[:, k:k + 1] * tap
        conv = acc + bcd
        conv = jnp.where(conv >= 0.0, conv, LRELU_SLOPE * conv)

        # CD_Conv output = cat(raw_frame, leakyrelu(conv)) along channels.
        feat_t = jnp.concatenate([x[:, :L_T], conv[:, :L_T]], axis=0)   # (NF, L_T)
        feat_c = jnp.concatenate([x[:, L_T:], conv[:, L_T:]], axis=0)   # (NF, HW)

        # ---- TA attention logits: conv3x3(cat(t, c)) via shift-after-matmul.
        #      'c' half is loop invariant (computed once, only (2, HW) kept).
        u_t = jnp.dot(wt, feat_t, preferred_element_type=jnp.float32)   # (18, L_T)
        u_c = jnp.dot(wc, feat_c, preferred_element_type=jnp.float32)   # (18, HW)
        att_t = jnp.zeros((2, L_T), jnp.float32)
        att_c = jnp.zeros((2, HW), jnp.float32)
        for k in range(9):
            off = offs[k]
            ut_k = u_t[2 * k:2 * k + 2, :]
            uc_k = u_c[2 * k:2 * k + 2, :]
            if off == 0:
                att_t = att_t + ut_k
                att_c = att_c + uc_k
            else:
                att_t = att_t + (pltpu.roll(ut_k, shift=(-off) % L_T, axis=1)
                                 * mask_ref[k:k + 1, 0:L_T])
                att_c = att_c + (pltpu.roll(uc_k, shift=(-off) % HW, axis=1)
                                 * mask_ref[k:k + 1, 0:HW])
        att_c = att_c + bta                                              # bias once
        att = jax.nn.sigmoid(att_t + jnp.concatenate([att_c] * (N - 1), axis=1))

        # ---- out_i = att0 * feat_i * v_t + att1 * feat_last * v_c (all frames)
        feat_c_rep = jnp.concatenate([feat_c] * (N - 1), axis=1)        # (NF, L_T)
        out_t = att[0:1, :] * feat_t * vt + att[1:2, :] * feat_c_rep * vc

        # buffer2 = cat(out_0, ..., out_{N-2}, feat_last) over channels:
        # de-stack lanes -> channels with full-width, sublane-aligned stores.
        for i in range(N - 1):
            o_ref[0, i * NF:(i + 1) * NF, :] = out_t[:, i * HW:(i + 1) * HW]
        o_ref[0, (N - 1) * NF:N * NF, :] = feat_c

    return kernel


def net_forward(x_bnchw, params):
    """Net.forward up to buffer2 (last fully-specified tensor). NCHW in/out."""
    B, N, C0, H, W = x_bnchw.shape
    assert C0 == 1, "init_conv1 is CD_Conv(1, nf-1): single input channel"
    assert N >= 2, "Net.forward needs at least two frames"
    HW = H * W
    CD_OUT = params["cd_w"].shape[0]            # nf - 1
    NF = CD_OUT + 1                             # nf

    # Frames lane-stacked: (B, 1, N*HW).  Free reshape, no padding needed.
    x_flat = x_bnchw.reshape(B, 1, N * HW).astype(jnp.float32)

    # Conv2d_cd folded into a plain 3x3 conv (modified centre tap, scaled bias).
    w = params["cd_w"][:, 0]                                     # (CD_OUT, 3, 3)
    w = w.at[:, 1, 1].add(-THETA * jnp.sum(w, axis=(1, 2)))
    w_cd = w.reshape(CD_OUT, 9)                                  # tap k = kh*3+kw
    b_cd = (1.0 - THETA) * params["cd_b"].reshape(CD_OUT)

    # TA conv weights split into 't' / 'c' input halves, row = 2*tap + out_ch.
    ta_w = params["ta_w"]                                        # (2, 2*NF, 3, 3)
    wt_mat = jnp.transpose(ta_w[:, :NF], (2, 3, 0, 1)).reshape(2 * 9, NF)
    wc_mat = jnp.transpose(ta_w[:, NF:], (2, 3, 0, 1)).reshape(2 * 9, NF)

    # Packed small params: (NF, 4) = [cd_bias | v_t | v_c | ta_bias].
    prm = jnp.zeros((NF, 4), jnp.float32)
    prm = prm.at[:CD_OUT, 0].set(b_cd)
    prm = prm.at[:, 1].set(params["v_t"].reshape(NF))
    prm = prm.at[:, 2].set(params["v_c"].reshape(NF))
    prm = prm.at[:2, 3].set(params["ta_b"].reshape(2))

    # Per-tap validity masks over the flattened image, tiled over the N frames.
    hh = jnp.arange(HW, dtype=jnp.int32) // W
    ww = jnp.arange(HW, dtype=jnp.int32) % W
    rows = []
    for k in range(9):
        dh, dw = divmod(k, 3)
        valid = ((hh + (dh - 1) >= 0) & (hh + (dh - 1) < H) &
                 (ww + (dw - 1) >= 0) & (ww + (dw - 1) < W))
        rows.append(valid)
    masks = jnp.stack(rows, axis=0).astype(jnp.float32)          # (9, HW)
    masks = jnp.tile(masks, (1, N))                              # (9, N*HW)

    kernel = _make_net_kernel(N, H, W, NF, CD_OUT)
    out_flat = pl.pallas_call(
        kernel,
        out_shape=jax.ShapeDtypeStruct((B, N * NF, HW), jnp.float32),
        grid=(B,),
        in_specs=[
            pl.BlockSpec((1, 1, N * HW), lambda b: (b, 0, 0)),
            pl.BlockSpec((CD_OUT, 9), lambda b: (0, 0)),
            pl.BlockSpec((2 * 9, NF), lambda b: (0, 0)),
            pl.BlockSpec((2 * 9, NF), lambda b: (0, 0)),
            pl.BlockSpec((9, N * HW), lambda b: (0, 0)),
            pl.BlockSpec((NF, 4), lambda b: (0, 0)),
        ],
        out_specs=pl.BlockSpec((1, N * NF, HW), lambda b: (b, 0, 0)),
        compiler_params=pltpu.CompilerParams(
            dimension_semantics=("parallel",)),
    )(x_flat, w_cd, wt_mat, wc_mat, masks, prm)

    # buffer2 back to NCHW; splitting the flat spatial axis is a free reshape.
    return out_flat.reshape(B, N * NF, H, W)


# ----------------------------- pure-JAX reference ----------------------------
def _conv2d_nchw(x, w, b, padding):
    out = lax.conv_general_dilated(
        x, w, window_strides=(1, 1),
        padding=[(padding, padding), (padding, padding)],
        dimension_numbers=("NCHW", "OIHW", "NCHW"),
        precision=lax.Precision.HIGHEST)
    if b is not None:
        out = out + b[None, :, None, None]
    return out


def net_forward_reference(x, params):
    """Literal transcription of the PyTorch forward (up to buffer2)."""
    B, N, C0, H, W = x.shape
    w_cd, b_cd = params["cd_w"], params["cd_b"]
    NF = w_cd.shape[0] + 1

    def conv2d_cd(inp):
        out_normal = _conv2d_nchw(inp, w_cd, b_cd, padding=1)
        kdiff = jnp.sum(w_cd, axis=(2, 3))[:, :, None, None]
        out_diff = _conv2d_nchw(inp, kdiff, b_cd, padding=0)
        return out_normal - THETA * out_diff

    def cd_conv(inp):
        buf = conv2d_cd(inp)
        out = jnp.where(buf >= 0.0, buf, LRELU_SLOPE * buf)
        return jnp.concatenate([inp, out], axis=1)

    def ta(t, c):
        attmap = _conv2d_nchw(jnp.concatenate([t, c], axis=1),
                              params["ta_w"], params["ta_b"], padding=1)
        attmap = jax.nn.sigmoid(attmap)
        tt = attmap[:, 0:1] * t * params["v_t"].reshape(1, NF, 1, 1)
        cc = attmap[:, 1:2] * c * params["v_c"].reshape(1, NF, 1, 1)
        return tt + cc

    x1 = cd_conv(x[:, -1])
    x_m = [ta(cd_conv(x[:, i]), x1) for i in range(N - 1)]
    return jnp.concatenate(x_m + [x1], axis=1)


if __name__ == "__main__":
    B, N, C0, H, W = 2, 3, 1, 16, 16
    nf = 16

    keys = jax.random.split(jax.random.PRNGKey(0), 8)
    x = jax.random.normal(keys[0], (B, N, C0, H, W), jnp.float32)

    # Deterministic synthetic parameters (shapes from Net.__init__ with nf=16)
    params = {
        # Conv2d_cd inside CD_Conv(1, nf-1): weight (15, 1, 3, 3), bias (15,)
        "cd_w": 0.1 * jax.random.normal(keys[1], (nf - 1, 1, 3, 3), jnp.float32),
        "cd_b": 0.1 * jax.random.normal(keys[2], (nf - 1,), jnp.float32),
        # TA(in_dim=nf): conv weight (2, 2*nf, 3, 3), bias (2,)
        "ta_w": 0.05 * jax.random.normal(keys[3], (2, 2 * nf, 3, 3), jnp.float32),
        "ta_b": 0.05 * jax.random.normal(keys[4], (2,), jnp.float32),
        "v_t": jax.random.normal(keys[5], (nf,), jnp.float32),
        "v_c": jax.random.normal(keys[6], (nf,), jnp.float32),
    }

    out = jax.jit(net_forward)(x, params)
    jax.block_until_ready(out)
    assert out.shape == (B, N * nf, H, W), out.shape
    assert out.dtype == jnp.float32

    # Reference comparison (independent lax.conv path), as requested in review.
    ref = jax.jit(net_forward_reference)(x, params)
    jax.block_until_ready(ref)
    err = float(jnp.max(jnp.abs(out - ref)))
    assert err < 2e-2, f"kernel/reference mismatch, max abs err = {err}"

    print("KERNEL_OK")
</pallas_src>

<mosaic_0001>
module attributes {stable_mosaic.version = 11 : i64} {
  func.func @kernel(%arg0: i32, %arg1: memref<1x1x768xf32, #tpu.memory_space<vmem>>, %arg2: memref<15x9xf32, #tpu.memory_space<vmem>>, %arg3: memref<18x16xf32, #tpu.memory_space<vmem>>, %arg4: memref<18x16xf32, #tpu.memory_space<vmem>>, %arg5: memref<9x768xf32, #tpu.memory_space<vmem>>, %arg6: memref<16x4xf32, #tpu.memory_space<vmem>>, %arg7: memref<1x48x256xf32, #tpu.memory_space<vmem>>) attributes {dimension_semantics = [#tpu.dimension_semantics<parallel>], iteration_bounds = array<i64: 2>, scalar_prefetch = 0 : i64, scratch_operands = 0 : i64, tpu.core_type = #tpu.core_type<tc>, window_params = [{transform_indices = @transform_0, window_bounds = array<i64: 1, 1, 768>}, {pipeline_mode = #tpu.pipeline_mode<synchronous>, transform_indices = @transform_1, window_bounds = array<i64: 15, 9>}, {pipeline_mode = #tpu.pipeline_mode<synchronous>, transform_indices = @transform_2, window_bounds = array<i64: 18, 16>}, {pipeline_mode = #tpu.pipeline_mode<synchronous>, transform_indices = @transform_3, window_bounds = array<i64: 18, 16>}, {pipeline_mode = #tpu.pipeline_mode<synchronous>, transform_indices = @transform_4, window_bounds = array<i64: 9, 768>}, {pipeline_mode = #tpu.pipeline_mode<synchronous>, transform_indices = @transform_5, window_bounds = array<i64: 16, 4>}, {transform_indices = @transform_6, window_bounds = array<i64: 1, 48, 256>}]} {
    %c0 = arith.constant 0 : index
    %c0_0 = arith.constant 0 : index
    %c0_1 = arith.constant 0 : index
    %0 = vector.load %arg1[%c0, %c0_0, %c0_1] : memref<1x1x768xf32, #tpu.memory_space<vmem>>, vector<1x1x768xf32>
    %1 = vector.shape_cast %0 : vector<1x1x768xf32> to vector<1x768xf32>
    %c0_2 = arith.constant 0 : index
    %c0_3 = arith.constant 0 : index
    %2 = vector.load %arg2[%c0_2, %c0_3] : memref<15x9xf32, #tpu.memory_space<vmem>>, vector<15x9xf32>
    %c0_4 = arith.constant 0 : index
    %c0_5 = arith.constant 0 : index
    %3 = vector.load %arg3[%c0_4, %c0_5] : memref<18x16xf32, #tpu.memory_space<vmem>>, vector<18x16xf32>
    %c0_6 = arith.constant 0 : index
    %c0_7 = arith.constant 0 : index
    %4 = vector.load %arg4[%c0_6, %c0_7] : memref<18x16xf32, #tpu.memory_space<vmem>>, vector<18x16xf32>
    %c0_8 = arith.constant 0 : index
    %c0_9 = arith.constant 0 : index
    %5 = vector.load %arg6[%c0_8, %c0_9] : memref<16x4xf32, #tpu.memory_space<vmem>>, vector<15x1xf32>
    %c0_10 = arith.constant 0 : index
    %c1 = arith.constant 1 : index
    %6 = vector.load %arg6[%c0_10, %c1] : memref<16x4xf32, #tpu.memory_space<vmem>>, vector<16x1xf32>
    %c0_11 = arith.constant 0 : index
    %c2 = arith.constant 2 : index
    %7 = vector.load %arg6[%c0_11, %c2] : memref<16x4xf32, #tpu.memory_space<vmem>>, vector<16x1xf32>
    %c0_12 = arith.constant 0 : index
    %c3 = arith.constant 3 : index
    %8 = vector.load %arg6[%c0_12, %c3] : memref<16x4xf32, #tpu.memory_space<vmem>>, vector<2x1xf32>
    %cst = arith.constant 0.000000e+00 : f32
    %9 = vector.broadcast %cst : f32 to vector<15x768xf32>
    %c17_i32 = arith.constant 17 : i32
    %10 = tpu.dynamic_rotate %1 by %c17_i32 dim 1 : vector<1x768xf32>, i32 -> vector<1x768xf32>
    %c0_13 = arith.constant 0 : index
    %c0_14 = arith.constant 0 : index
    %11 = vector.load %arg5[%c0_13, %c0_14] : memref<9x768xf32, #tpu.memory_space<vmem>>, vector<1x768xf32>
    %12 = arith.mulf %10, %11 : vector<1x768xf32>
    %13 = vector.extract_strided_slice %2 {offsets = [0, 0], sizes = [15, 1], strides = [1, 1]} : vector<15x9xf32> to vector<15x1xf32>
    %14 = vector.broadcast %13 : vector<15x1xf32> to vector<15x768xf32>
    %15 = vector.broadcast %12 : vector<1x768xf32> to vector<15x768xf32>
    %16 = arith.mulf %14, %15 : vector<15x768xf32>
    %17 = arith.addf %9, %16 : vector<15x768xf32>
    %c16_i32 = arith.constant 16 : i32
    %18 = tpu.dynamic_rotate %1 by %c16_i32 dim 1 : vector<1x768xf32>, i32 -> vector<1x768xf32>
    %c1_15 = arith.constant 1 : index
    %c0_16 = arith.constant 0 : index
    %19 = vector.load %arg5[%c1_15, %c0_16] : memref<9x768xf32, #tpu.memory_space<vmem>>, vector<1x768xf32>
    %20 = arith.mulf %18, %19 : vector<1x768xf32>
    %21 = vector.extract_strided_slice %2 {offsets = [0, 1], sizes = [15, 1], strides = [1, 1]} : vector<15x9xf32> to vector<15x1xf32>
    %22 = vector.broadcast %21 : vector<15x1xf32> to vector<15x768xf32>
    %23 = vector.broadcast %20 : vector<1x768xf32> to vector<15x768xf32>
    %24 = arith.mulf %22, %23 : vector<15x768xf32>
    %25 = arith.addf %17, %24 : vector<15x768xf32>
    %c15_i32 = arith.constant 15 : i32
    %26 = tpu.dynamic_rotate %1 by %c15_i32 dim 1 : vector<1x768xf32>, i32 -> vector<1x768xf32>
    %c2_17 = arith.constant 2 : index
    %c0_18 = arith.constant 0 : index
    %27 = vector.load %arg5[%c2_17, %c0_18] : memref<9x768xf32, #tpu.memory_space<vmem>>, vector<1x768xf32>
    %28 = arith.mulf %26, %27 : vector<1x768xf32>
    %29 = vector.extract_strided_slice %2 {offsets = [0, 2], sizes = [15, 1], strides = [1, 1]} : vector<15x9xf32> to vector<15x1xf32>
    %30 = vector.broadcast %29 : vector<15x1xf32> to vector<15x768xf32>
    %31 = vector.broadcast %28 : vector<1x768xf32> to vector<15x768xf32>
    %32 = arith.mulf %30, %31 : vector<15x768xf32>
    %33 = arith.addf %25, %32 : vector<15x768xf32>
    %c1_i32 = arith.constant 1 : i32
    %34 = tpu.dynamic_rotate %1 by %c1_i32 dim 1 : vector<1x768xf32>, i32 -> vector<1x768xf32>
    %c3_19 = arith.constant 3 : index
    %c0_20 = arith.constant 0 : index
    %35 = vector.load %arg5[%c3_19, %c0_20] : memref<9x768xf32, #tpu.memory_space<vmem>>, vector<1x768xf32>
    %36 = arith.mulf %34, %35 : vector<1x768xf32>
    %37 = vector.extract_strided_slice %2 {offsets = [0, 3], sizes = [15, 1], strides = [1, 1]} : vector<15x9xf32> to vector<15x1xf32>
    %38 = vector.broadcast %37 : vector<15x1xf32> to vector<15x768xf32>
    %39 = vector.broadcast %36 : vector<1x768xf32> to vector<15x768xf32>
    %40 = arith.mulf %38, %39 : vector<15x768xf32>
    %41 = arith.addf %33, %40 : vector<15x768xf32>
    %42 = vector.extract_strided_slice %2 {offsets = [0, 4], sizes = [15, 1], strides = [1, 1]} : vector<15x9xf32> to vector<15x1xf32>
    %43 = vector.broadcast %42 : vector<15x1xf32> to vector<15x768xf32>
    %44 = vector.broadcast %1 : vector<1x768xf32> to vector<15x768xf32>
    %45 = arith.mulf %43, %44 : vector<15x768xf32>
    %46 = arith.addf %41, %45 : vector<15x768xf32>
    %c767_i32 = arith.constant 767 : i32
    %47 = tpu.dynamic_rotate %1 by %c767_i32 dim 1 : vector<1x768xf32>, i32 -> vector<1x768xf32>
    %c5 = arith.constant 5 : index
    %c0_21 = arith.constant 0 : index
    %48 = vector.load %arg5[%c5, %c0_21] : memref<9x768xf32, #tpu.memory_space<vmem>>, vector<1x768xf32>
    %49 = arith.mulf %47, %48 : vector<1x768xf32>
    %50 = vector.extract_strided_slice %2 {offsets = [0, 5], sizes = [15, 1], strides = [1, 1]} : vector<15x9xf32> to vector<15x1xf32>
    %51 = vector.broadcast %50 : vector<15x1xf32> to vector<15x768xf32>
    %52 = vector.broadcast %49 : vector<1x768xf32> to vector<15x768xf32>
    %53 = arith.mulf %51, %52 : vector<15x768xf32>
    %54 = arith.addf %46, %53 : vector<15x768xf32>
    %c753_i32 = arith.constant 753 : i32
    %55 = tpu.dynamic_rotate %1 by %c753_i32 dim 1 : vector<1x768xf32>, i32 -> vector<1x768xf32>
    %c6 = arith.constant 6 : index
    %c0_22 = arith.constant 0 : index
    %56 = vector.load %arg5[%c6, %c0_22] : memref<9x768xf32, #tpu.memory_space<vmem>>, vector<1x768xf32>
    %57 = arith.mulf %55, %56 : vector<1x768xf32>
    %58 = vector.extract_strided_slice %2 {offsets = [0, 6], sizes = [15, 1], strides = [1, 1]} : vector<15x9xf32> to vector<15x1xf32>
    %59 = vector.broadcast %58 : vector<15x1xf32> to vector<15x768xf32>
    %60 = vector.broadcast %57 : vector<1x768xf32> to vector<15x768xf32>
    %61 = arith.mulf %59, %60 : vector<15x768xf32>
    %62 = arith.addf %54, %61 : vector<15x768xf32>
    %c752_i32 = arith.constant 752 : i32
    %63 = tpu.dynamic_rotate %1 by %c752_i32 dim 1 : vector<1x768xf32>, i32 -> vector<1x768xf32>
    %c7 = arith.constant 7 : index
    %c0_23 = arith.constant 0 : index
    %64 = vector.load %arg5[%c7, %c0_23] : memref<9x768xf32, #tpu.memory_space<vmem>>, vector<1x768xf32>
    %65 = arith.mulf %63, %64 : vector<1x768xf32>
    %66 = vector.extract_strided_slice %2 {offsets = [0, 7], sizes = [15, 1], strides = [1, 1]} : vector<15x9xf32> to vector<15x1xf32>
    %67 = vector.broadcast %66 : vector<15x1xf32> to vector<15x768xf32>
    %68 = vector.broadcast %65 : vector<1x768xf32> to vector<15x768xf32>
    %69 = arith.mulf %67, %68 : vector<15x768xf32>
    %70 = arith.addf %62, %69 : vector<15x768xf32>
    %c751_i32 = arith.constant 751 : i32
    %71 = tpu.dynamic_rotate %1 by %c751_i32 dim 1 : vector<1x768xf32>, i32 -> vector<1x768xf32>
    %c8 = arith.constant 8 : index
    %c0_24 = arith.constant 0 : index
    %72 = vector.load %arg5[%c8, %c0_24] : memref<9x768xf32, #tpu.memory_space<vmem>>, vector<1x768xf32>
    %73 = arith.mulf %71, %72 : vector<1x768xf32>
    %74 = vector.extract_strided_slice %2 {offsets = [0, 8], sizes = [15, 1], strides = [1, 1]} : vector<15x9xf32> to vector<15x1xf32>
    %75 = vector.broadcast %74 : vector<15x1xf32> to vector<15x768xf32>
    %76 = vector.broadcast %73 : vector<1x768xf32> to vector<15x768xf32>
    %77 = arith.mulf %75, %76 : vector<15x768xf32>
    %78 = arith.addf %70, %77 : vector<15x768xf32>
    %79 = vector.broadcast %5 : vector<15x1xf32> to vector<15x768xf32>
    %80 = arith.addf %78, %79 : vector<15x768xf32>
    %cst_25 = arith.constant 0.000000e+00 : f32
    %81 = vector.broadcast %cst_25 : f32 to vector<15x768xf32>
    %82 = arith.cmpf oge, %80, %81 : vector<15x768xf32>
    %cst_26 = arith.constant 1.000000e-01 : f32
    %83 = vector.broadcast %cst_26 : f32 to vector<15x768xf32>
    %84 = arith.mulf %83, %80 : vector<15x768xf32>
    %85 = arith.select %82, %80, %84 : vector<15x768xi1>, vector<15x768xf32>
    %86 = vector.extract_strided_slice %1 {offsets = [0, 0], sizes = [1, 512], strides = [1, 1]} : vector<1x768xf32> to vector<1x512xf32>
    %87 = vector.extract_strided_slice %85 {offsets = [0, 0], sizes = [15, 512], strides = [1, 1]} : vector<15x768xf32> to vector<15x512xf32>
    %88 = tpu.concatenate %86, %87 in 0 : vector<1x512xf32>, vector<15x512xf32> -> vector<16x512xf32>
    %89 = vector.extract_strided_slice %1 {offsets = [0, 512], sizes = [1, 256], strides = [1, 1]} : vector<1x768xf32> to vector<1x256xf32>
    %90 = vector.extract_strided_slice %85 {offsets = [0, 512], sizes = [15, 256], strides = [1, 1]} : vector<15x768xf32> to vector<15x256xf32>
    %91 = tpu.concatenate %89, %90 in 0 : vector<1x256xf32>, vector<15x256xf32> -> vector<16x256xf32>
    %cst_27 = arith.constant dense<0.000000e+00> : vector<18x512xf32>
    %92 = tpu.matmul %3, %88, %cst_27 {dimension_numbers = #tpu.dot_dimension_numbers<[1], [0], [0], [1], [0, 0, 1, 1], [], []>} : vector<18x16xf32>, vector<16x512xf32>, vector<18x512xf32> -> vector<18x512xf32>
    %cst_28 = arith.constant dense<0.000000e+00> : vector<18x256xf32>
    %93 = tpu.matmul %4, %91, %cst_28 {dimension_numbers = #tpu.dot_dimension_numbers<[1], [0], [0], [1], [0, 0, 1, 1], [], []>} : vector<18x16xf32>, vector<16x256xf32>, vector<18x256xf32> -> vector<18x256xf32>
    %cst_29 = arith.constant 0.000000e+00 : f32
    %94 = vector.broadcast %cst_29 : f32 to vector<2x512xf32>
    %cst_30 = arith.constant 0.000000e+00 : f32
    %95 = vector.broadcast %cst_30 : f32 to vector<2x256xf32>
    %96 = vector.extract_strided_slice %92 {offsets = [0, 0], sizes = [2, 512], strides = [1, 1]} : vector<18x512xf32> to vector<2x512xf32>
    %97 = vector.extract_strided_slice %93 {offsets = [0, 0], sizes = [2, 256], strides = [1, 1]} : vector<18x256xf32> to vector<2x256xf32>
    %c17_i32_31 = arith.constant 17 : i32
    %98 = tpu.dynamic_rotate %96 by %c17_i32_31 dim 1 : vector<2x512xf32>, i32 -> vector<2x512xf32>
    %c0_32 = arith.constant 0 : index
    %c0_33 = arith.constant 0 : index
    %99 = vector.load %arg5[%c0_32, %c0_33] : memref<9x768xf32, #tpu.memory_space<vmem>>, vector<1x512xf32>
    %100 = vector.broadcast %99 : vector<1x512xf32> to vector<2x512xf32>
    %101 = arith.mulf %98, %100 : vector<2x512xf32>
    %102 = arith.addf %94, %101 : vector<2x512xf32>
    %c17_i32_34 = arith.constant 17 : i32
    %103 = tpu.dynamic_rotate %97 by %c17_i32_34 dim 1 : vector<2x256xf32>, i32 -> vector<2x256xf32>
    %c0_35 = arith.constant 0 : index
    %c0_36 = arith.constant 0 : index
    %104 = vector.load %arg5[%c0_35, %c0_36] : memref<9x768xf32, #tpu.memory_space<vmem>>, vector<1x256xf32>
    %105 = vector.broadcast %104 : vector<1x256xf32> to vector<2x256xf32>
    %106 = arith.mulf %103, %105 : vector<2x256xf32>
    %107 = arith.addf %95, %106 : vector<2x256xf32>
    %108 = vector.extract_strided_slice %92 {offsets = [2, 0], sizes = [2, 512], strides = [1, 1]} : vector<18x512xf32> to vector<2x512xf32>
    %109 = vector.extract_strided_slice %93 {offsets = [2, 0], sizes = [2, 256], strides = [1, 1]} : vector<18x256xf32> to vector<2x256xf32>
    %c16_i32_37 = arith.constant 16 : i32
    %110 = tpu.dynamic_rotate %108 by %c16_i32_37 dim 1 : vector<2x512xf32>, i32 -> vector<2x512xf32>
    %c1_38 = arith.constant 1 : index
    %c0_39 = arith.constant 0 : index
    %111 = vector.load %arg5[%c1_38, %c0_39] : memref<9x768xf32, #tpu.memory_space<vmem>>, vector<1x512xf32>
    %112 = vector.broadcast %111 : vector<1x512xf32> to vector<2x512xf32>
    %113 = arith.mulf %110, %112 : vector<2x512xf32>
    %114 = arith.addf %102, %113 : vector<2x512xf32>
    %c16_i32_40 = arith.constant 16 : i32
    %115 = tpu.dynamic_rotate %109 by %c16_i32_40 dim 1 : vector<2x256xf32>, i32 -> vector<2x256xf32>
    %c1_41 = arith.constant 1 : index
    %c0_42 = arith.constant 0 : index
    %116 = vector.load %arg5[%c1_41, %c0_42] : memref<9x768xf32, #tpu.memory_space<vmem>>, vector<1x256xf32>
    %117 = vector.broadcast %116 : vector<1x256xf32> to vector<2x256xf32>
    %118 = arith.mulf %115, %117 : vector<2x256xf32>
    %119 = arith.addf %107, %118 : vector<2x256xf32>
    %120 = vector.extract_strided_slice %92 {offsets = [4, 0], sizes = [2, 512], strides = [1, 1]} : vector<18x512xf32> to vector<2x512xf32>
    %121 = vector.extract_strided_slice %93 {offsets = [4, 0], sizes = [2, 256], strides = [1, 1]} : vector<18x256xf32> to vector<2x256xf32>
    %c15_i32_43 = arith.constant 15 : i32
    %122 = tpu.dynamic_rotate %120 by %c15_i32_43 dim 1 : vector<2x512xf32>, i32 -> vector<2x512xf32>
    %c2_44 = arith.constant 2 : index
    %c0_45 = arith.constant 0 : index
    %123 = vector.load %arg5[%c2_44, %c0_45] : memref<9x768xf32, #tpu.memory_space<vmem>>, vector<1x512xf32>
    %124 = vector.broadcast %123 : vector<1x512xf32> to vector<2x512xf32>
    %125 = arith.mulf %122, %124 : vector<2x512xf32>
    %126 = arith.addf %114, %125 : vector<2x512xf32>
    %c15_i32_46 = arith.constant 15 : i32
    %127 = tpu.dynamic_rotate %121 by %c15_i32_46 dim 1 : vector<2x256xf32>, i32 -> vector<2x256xf32>
    %c2_47 = arith.constant 2 : index
    %c0_48 = arith.constant 0 : index
    %128 = vector.load %arg5[%c2_47, %c0_48] : memref<9x768xf32, #tpu.memory_space<vmem>>, vector<1x256xf32>
    %129 = vector.broadcast %128 : vector<1x256xf32> to vector<2x256xf32>
    %130 = arith.mulf %127, %129 : vector<2x256xf32>
    %131 = arith.addf %119, %130 : vector<2x256xf32>
    %132 = vector.extract_strided_slice %92 {offsets = [6, 0], sizes = [2, 512], strides = [1, 1]} : vector<18x512xf32> to vector<2x512xf32>
    %133 = vector.extract_strided_slice %93 {offsets = [6, 0], sizes = [2, 256], strides = [1, 1]} : vector<18x256xf32> to vector<2x256xf32>
    %c1_i32_49 = arith.constant 1 : i32
    %134 = tpu.dynamic_rotate %132 by %c1_i32_49 dim 1 : vector<2x512xf32>, i32 -> vector<2x512xf32>
    %c3_50 = arith.constant 3 : index
    %c0_51 = arith.constant 0 : index
    %135 = vector.load %arg5[%c3_50, %c0_51] : memref<9x768xf32, #tpu.memory_space<vmem>>, vector<1x512xf32>
    %136 = vector.broadcast %135 : vector<1x512xf32> to vector<2x512xf32>
    %137 = arith.mulf %134, %136 : vector<2x512xf32>
    %138 = arith.addf %126, %137 : vector<2x512xf32>
    %c1_i32_52 = arith.constant 1 : i32
    %139 = tpu.dynamic_rotate %133 by %c1_i32_52 dim 1 : vector<2x256xf32>, i32 -> vector<2x256xf32>
    %c3_53 = arith.constant 3 : index
    %c0_54 = arith.constant 0 : index
    %140 = vector.load %arg5[%c3_53, %c0_54] : memref<9x768xf32, #tpu.memory_space<vmem>>, vector<1x256xf32>
    %141 = vector.broadcast %140 : vector<1x256xf32> to vector<2x256xf32>
    %142 = arith.mulf %139, %141 : vector<2x256xf32>
    %143 = arith.addf %131, %142 : vector<2x256xf32>
    %144 = vector.extract_strided_slice %92 {offsets = [8, 0], sizes = [2, 512], strides = [1, 1]} : vector<18x512xf32> to vector<2x512xf32>
    %145 = vector.extract_strided_slice %93 {offsets = [8, 0], sizes = [2, 256], strides = [1, 1]} : vector<18x256xf32> to vector<2x256xf32>
    %146 = arith.addf %138, %144 : vector<2x512xf32>
    %147 = arith.addf %143, %145 : vector<2x256xf32>
    %148 = vector.extract_strided_slice %92 {offsets = [10, 0], sizes = [2, 512], strides = [1, 1]} : vector<18x512xf32> to vector<2x512xf32>
    %149 = vector.extract_strided_slice %93 {offsets = [10, 0], sizes = [2, 256], strides = [1, 1]} : vector<18x256xf32> to vector<2x256xf32>
    %c511_i32 = arith.constant 511 : i32
    %150 = tpu.dynamic_rotate %148 by %c511_i32 dim 1 : vector<2x512xf32>, i32 -> vector<2x512xf32>
    %c5_55 = arith.constant 5 : index
    %c0_56 = arith.constant 0 : index
    %151 = vector.load %arg5[%c5_55, %c0_56] : memref<9x768xf32, #tpu.memory_space<vmem>>, vector<1x512xf32>
    %152 = vector.broadcast %151 : vector<1x512xf32> to vector<2x512xf32>
    %153 = arith.mulf %150, %152 : vector<2x512xf32>
    %154 = arith.addf %146, %153 : vector<2x512xf32>
    %c255_i32 = arith.constant 255 : i32
    %155 = tpu.dynamic_rotate %149 by %c255_i32 dim 1 : vector<2x256xf32>, i32 -> vector<2x256xf32>
    %c5_57 = arith.constant 5 : index
    %c0_58 = arith.constant 0 : index
    %156 = vector.load %arg5[%c5_57, %c0_58] : memref<9x768xf32, #tpu.memory_space<vmem>>, vector<1x256xf32>
    %157 = vector.broadcast %156 : vector<1x256xf32> to vector<2x256xf32>
    %158 = arith.mulf %155, %157 : vector<2x256xf32>
    %159 = arith.addf %147, %158 : vector<2x256xf32>
    %160 = vector.extract_strided_slice %92 {offsets = [12, 0], sizes = [2, 512], strides = [1, 1]} : vector<18x512xf32> to vector<2x512xf32>
    %161 = vector.extract_strided_slice %93 {offsets = [12, 0], sizes = [2, 256], strides = [1, 1]} : vector<18x256xf32> to vector<2x256xf32>
    %c497_i32 = arith.constant 497 : i32
    %162 = tpu.dynamic_rotate %160 by %c497_i32 dim 1 : vector<2x512xf32>, i32 -> vector<2x512xf32>
    %c6_59 = arith.constant 6 : index
    %c0_60 = arith.constant 0 : index
    %163 = vector.load %arg5[%c6_59, %c0_60] : memref<9x768xf32, #tpu.memory_space<vmem>>, vector<1x512xf32>
    %164 = vector.broadcast %163 : vector<1x512xf32> to vector<2x512xf32>
    %165 = arith.mulf %162, %164 : vector<2x512xf32>
    %166 = arith.addf %154, %165 : vector<2x512xf32>
    %c241_i32 = arith.constant 241 : i32
    %167 = tpu.dynamic_rotate %161 by %c241_i32 dim 1 : vector<2x256xf32>, i32 -> vector<2x256xf32>
    %c6_61 = arith.constant 6 : index
    %c0_62 = arith.constant 0 : index
    %168 = vector.load %arg5[%c6_61, %c0_62] : memref<9x768xf32, #tpu.memory_space<vmem>>, vector<1x256xf32>
    %169 = vector.broadcast %168 : vector<1x256xf32> to vector<2x256xf32>
    %170 = arith.mulf %167, %169 : vector<2x256xf32>
    %171 = arith.addf %159, %170 : vector<2x256xf32>
    %172 = vector.extract_strided_slice %92 {offsets = [14, 0], sizes = [2, 512], strides = [1, 1]} : vector<18x512xf32> to vector<2x512xf32>
    %173 = vector.extract_strided_slice %93 {offsets = [14, 0], sizes = [2, 256], strides = [1, 1]} : vector<18x256xf32> to vector<2x256xf32>
    %c496_i32 = arith.constant 496 : i32
    %174 = tpu.dynamic_rotate %172 by %c496_i32 dim 1 : vector<2x512xf32>, i32 -> vector<2x512xf32>
    %c7_63 = arith.constant 7 : index
    %c0_64 = arith.constant 0 : index
    %175 = vector.load %arg5[%c7_63, %c0_64] : memref<9x768xf32, #tpu.memory_space<vmem>>, vector<1x512xf32>
    %176 = vector.broadcast %175 : vector<1x512xf32> to vector<2x512xf32>
    %177 = arith.mulf %174, %176 : vector<2x512xf32>
    %178 = arith.addf %166, %177 : vector<2x512xf32>
    %c240_i32 = arith.constant 240 : i32
    %179 = tpu.dynamic_rotate %173 by %c240_i32 dim 1 : vector<2x256xf32>, i32 -> vector<2x256xf32>
    %c7_65 = arith.constant 7 : index
    %c0_66 = arith.constant 0 : index
    %180 = vector.load %arg5[%c7_65, %c0_66] : memref<9x768xf32, #tpu.memory_space<vmem>>, vector<1x256xf32>
    %181 = vector.broadcast %180 : vector<1x256xf32> to vector<2x256xf32>
    %182 = arith.mulf %179, %181 : vector<2x256xf32>
    %183 = arith.addf %171, %182 : vector<2x256xf32>
    %184 = vector.extract_strided_slice %92 {offsets = [16, 0], sizes = [2, 512], strides = [1, 1]} : vector<18x512xf32> to vector<2x512xf32>
    %185 = vector.extract_strided_slice %93 {offsets = [16, 0], sizes = [2, 256], strides = [1, 1]} : vector<18x256xf32> to vector<2x256xf32>
    %c495_i32 = arith.constant 495 : i32
    %186 = tpu.dynamic_rotate %184 by %c495_i32 dim 1 : vector<2x512xf32>, i32 -> vector<2x512xf32>
    %c8_67 = arith.constant 8 : index
    %c0_68 = arith.constant 0 : index
    %187 = vector.load %arg5[%c8_67, %c0_68] : memref<9x768xf32, #tpu.memory_space<vmem>>, vector<1x512xf32>
    %188 = vector.broadcast %187 : vector<1x512xf32> to vector<2x512xf32>
    %189 = arith.mulf %186, %188 : vector<2x512xf32>
    %190 = arith.addf %178, %189 : vector<2x512xf32>
    %c239_i32 = arith.constant 239 : i32
    %191 = tpu.dynamic_rotate %185 by %c239_i32 dim 1 : vector<2x256xf32>, i32 -> vector<2x256xf32>
    %c8_69 = arith.constant 8 : index
    %c0_70 = arith.constant 0 : index
    %192 = vector.load %arg5[%c8_69, %c0_70] : memref<9x768xf32, #tpu.memory_space<vmem>>, vector<1x256xf32>
    %193 = vector.broadcast %192 : vector<1x256xf32> to vector<2x256xf32>
    %194 = arith.mulf %191, %193 : vector<2x256xf32>
    %195 = arith.addf %183, %194 : vector<2x256xf32>
    %196 = vector.broadcast %8 : vector<2x1xf32> to vector<2x256xf32>
    %197 = arith.addf %195, %196 : vector<2x256xf32>
    %198 = tpu.concatenate %197, %197 in 1 : vector<2x256xf32>, vector<2x256xf32> -> vector<2x512xf32>
    %199 = arith.addf %190, %198 : vector<2x512xf32>
    %200 = arith.negf %199 : vector<2x512xf32>
    %201 = math.exp %200 : vector<2x512xf32>
    %cst_71 = arith.constant 1.000000e+00 : f32
    %202 = vector.broadcast %cst_71 : f32 to vector<2x512xf32>
    %203 = arith.addf %202, %201 : vector<2x512xf32>
    %204 = arith.divf %202, %203 : vector<2x512xf32>
    %205 = tpu.concatenate %91, %91 in 1 : vector<16x256xf32>, vector<16x256xf32> -> vector<16x512xf32>
    %206 = vector.extract_strided_slice %204 {offsets = [0, 0], sizes = [1, 512], strides = [1, 1]} : vector<2x512xf32> to vector<1x512xf32>
    %207 = vector.broadcast %206 : vector<1x512xf32> to vector<16x512xf32>
    %208 = arith.mulf %207, %88 : vector<16x512xf32>
    %209 = vector.broadcast %6 : vector<16x1xf32> to vector<16x512xf32>
    %210 = arith.mulf %208, %209 : vector<16x512xf32>
    %211 = vector.extract_strided_slice %204 {offsets = [1, 0], sizes = [1, 512], strides = [1, 1]} : vector<2x512xf32> to vector<1x512xf32>
    %212 = vector.broadcast %211 : vector<1x512xf32> to vector<16x512xf32>
    %213 = arith.mulf %212, %205 : vector<16x512xf32>
    %214 = vector.broadcast %7 : vector<16x1xf32> to vector<16x512xf32>
    %215 = arith.mulf %213, %214 : vector<16x512xf32>
    %216 = arith.addf %210, %215 : vector<16x512xf32>
    %217 = vector.extract_strided_slice %216 {offsets = [0, 0], sizes = [16, 256], strides = [1, 1]} : vector<16x512xf32> to vector<16x256xf32>
    %c0_72 = arith.constant 0 : index
    %c0_73 = arith.constant 0 : index
    %c0_74 = arith.constant 0 : index
    %218 = vector.load %arg7[%c0_72, %c0_73, %c0_74] : memref<1x48x256xf32, #tpu.memory_space<vmem>>, vector<1x16x256xf32>
    %219 = vector.shape_cast %218 : vector<1x16x256xf32> to vector<16x256xf32>
    %220 = vector.shape_cast %217 : vector<16x256xf32> to vector<1x16x256xf32>
    tpu.vector_store %arg7[%c0_72, %c0_73, %c0_74], %220 {strides = array<i32>} : memref<1x48x256xf32, #tpu.memory_space<vmem>>, vector<1x16x256xf32>,
    %221 = vector.extract_strided_slice %216 {offsets = [0, 256], sizes = [16, 256], strides = [1, 1]} : vector<16x512xf32> to vector<16x256xf32>
    %c0_75 = arith.constant 0 : index
    %c16 = arith.constant 16 : index
    %c0_76 = arith.constant 0 : index
    %222 = vector.load %arg7[%c0_75, %c16, %c0_76] : memref<1x48x256xf32, #tpu.memory_space<vmem>>, vector<1x16x256xf32>
    %223 = vector.shape_cast %222 : vector<1x16x256xf32> to vector<16x256xf32>
    %224 = vector.shape_cast %221 : vector<16x256xf32> to vector<1x16x256xf32>
    tpu.vector_store %arg7[%c0_75, %c16, %c0_76], %224 {strides = array<i32>} : memref<1x48x256xf32, #tpu.memory_space<vmem>>, vector<1x16x256xf32>,
    %c0_77 = arith.constant 0 : index
    %c32 = arith.constant 32 : index
    %c0_78 = arith.constant 0 : index
    %225 = vector.load %arg7[%c0_77, %c32, %c0_78] : memref<1x48x256xf32, #tpu.memory_space<vmem>>, vector<1x16x256xf32>
    %226 = vector.shape_cast %225 : vector<1x16x256xf32> to vector<16x256xf32>
    %227 = vector.shape_cast %91 : vector<16x256xf32> to vector<1x16x256xf32>
    tpu.vector_store %arg7[%c0_77, %c32, %c0_78], %227 {strides = array<i32>} : memref<1x48x256xf32, #tpu.memory_space<vmem>>, vector<1x16x256xf32>,
    return
  }
  func.func @transform_0(%arg0: i32) -> (i32, i32, i32) {
    %c0_i32 = arith.constant 0 : i32
    %c0_i32_0 = arith.constant 0 : i32
    %c0_i32_1 = arith.constant 0 : i32
    return %arg0, %c0_i32, %c0_i32_0 : i32, i32, i32
  }
  func.func @transform_1(%arg0: i32) -> (i32, i32) {
    %c0_i32 = arith.constant 0 : i32
    %c0_i32_0 = arith.constant 0 : i32
    %c0_i32_1 = arith.constant 0 : i32
    return %c0_i32, %c0_i32_0 : i32, i32
  }
  func.func @transform_2(%arg0: i32) -> (i32, i32) {
    %c0_i32 = arith.constant 0 : i32
    %c0_i32_0 = arith.constant 0 : i32
    %c0_i32_1 = arith.constant 0 : i32
    return %c0_i32, %c0_i32_0 : i32, i32
  }
  func.func @transform_3(%arg0: i32) -> (i32, i32) {
    %c0_i32 = arith.constant 0 : i32
    %c0_i32_0 = arith.constant 0 : i32
    %c0_i32_1 = arith.constant 0 : i32
    return %c0_i32, %c0_i32_0 : i32, i32
  }
  func.func @transform_4(%arg0: i32) -> (i32, i32) {
    %c0_i32 = arith.constant 0 : i32
    %c0_i32_0 = arith.constant 0 : i32
    %c0_i32_1 = arith.constant 0 : i32
    return %c0_i32, %c0_i32_0 : i32, i32
  }
  func.func @transform_5(%arg0: i32) -> (i32, i32) {
    %c0_i32 = arith.constant 0 : i32
    %c0_i32_0 = arith.constant 0 : i32
    %c0_i32_1 = arith.constant 0 : i32
    return %c0_i32, %c0_i32_0 : i32, i32
  }
  func.func @transform_6(%arg0: i32) -> (i32, i32, i32) {
    %c0_i32 = arith.constant 0 : i32
    %c0_i32_0 = arith.constant 0 : i32
    %c0_i32_1 = arith.constant 0 : i32
    return %arg0, %c0_i32, %c0_i32_0 : i32, i32, i32
  }
}

</mosaic_0001>

<llo_original>
// kernel: net_forward.1
$region0: #{net_forward.1}
  #allocation0 [shape = 'u32[]', space=smem, size = 0x4, offset = 0x4, fixed_abs, tag = 'smem constant byte address 0x4 - core index']
  #allocation1 [shape = 'u32[144,128]{1,0:T(1,128)}', space=vmem, size = 0x12000, scoped, tag = 'internal scratch']
  %s0 = inlined_call_operand.vmem [shape: f32[2,1,768], index: 0, kind: input, shape index: {}]
  %s1 = inlined_call_operand.vmem [shape: f32[15,9], index: 1, kind: input, shape index: {}]
  %s2 = inlined_call_operand.vmem [shape: f32[18,16], index: 2, kind: input, shape index: {}]
  %s3 = inlined_call_operand.vmem [shape: f32[18,16], index: 3, kind: input, shape index: {}]
  %s4 = inlined_call_operand.vmem [shape: f32[9,768], index: 4, kind: input, shape index: {}]
  %s5 = inlined_call_operand.vmem [shape: f32[16,4], index: 5, kind: input, shape index: {}]
  %s6 = inlined_call_operand.vmem [shape: f32[2,48,256], index: 6, kind: output, shape index: {}]
  %s7 = sld [smem:[#allocation0]]
  $region57: #{net_forward.1} parent=0
    _
  %s9 = ssub.s32 1, %s7
  %s10 = scalar_select 0, %s9, %s7
  loop: start=0, step=1, limit=4
  $region2: #{net_forward.1} parent=0 // loop_pre_header
    _
  $region3: #{net_forward.1} parent=0 // loop_header
    %s12 = sphi 0, %s16
    %p13 = scmp.ge.s32.totalorder %s12, 4
    %s22 = sphi 0, %s24
    %s25 = sphi 0, %s22
    %s26 = sphi 0, %s25
    %s42 = sphi 0, %s26
    %s46 = sphi 0, %s46
    %s48 = sphi 0, %s46
    %s49 = sphi 0, %s48
    %s63 = sphi 0, %s49
    %s67 = sphi 0, %s67
    %s69 = sphi 0, %s67
    %s70 = sphi 0, %s69
    %s84 = sphi 0, %s70
    %s88 = sphi 0, %s88
    %s90 = sphi 0, %s88
    %s91 = sphi 0, %s90
    %s105 = sphi 0, %s91
    %s109 = sphi 0, %s109
    %s111 = sphi 0, %s109
    %s112 = sphi 0, %s111
    %s126 = sphi 0, %s112
    %s130 = sphi 0, %s130
    %s132 = sphi 0, %s130
    %s133 = sphi 0, %s132
    %s147 = sphi 0, %s133
    %s153 = sphi 0, %s155
    %s156 = sphi 0, %s153
    %s157 = sphi 0, %s156
    %s173 = sphi 0, %s157
  $region4: #{net_forward.1} parent=0 // loop_header_branch
    %15 = sbr.rel (%p13) target = $region8
  $region5: #{net_forward.1} parent=0 // loop_body
    %s17 = ssub.s32 %s12, 1
    %s18 = ssub.s32 %s12, 2
    %s19 = sadd.s32 %s12, 1
    %s20 = ssub.s32 %s12, %s19
    %p21 = scmp.eq.s32.totalorder %s20, 0
    %s23 = sadd.s32 %s22, 1
    %s24 = scalar_select %p21, %s22, %s23
    %p27 = pneg %p21
    %p28 = scmp.eq.s32.totalorder %s12, 1
    %p29 = por %p27, %p28
    %p30 = scmp.ne.s32.totalorder %s22, %s25
    %p31 = scmp.eq.s32.totalorder %s12, 0
    %p32 = por %p30, %p31
    %p33 = scmp.ne.s32.totalorder %s22, %s25
    %p34 = scmp.eq.s32.totalorder %s17, 1
    %p35 = por %p33, %p34
    %p36 = scmp.ne.s32.totalorder %s25, %s26
    %p37 = scmp.eq.s32.totalorder %s17, 0
    %p38 = por %p36, %p37
    %p39 = scmp.ne.s32.totalorder %s25, %s26
    %p40 = scmp.eq.s32.totalorder %s18, 1
    %p41 = por %p39, %p40
    %p43 = scmp.ne.s32.totalorder %s26, %s42
    %p44 = scmp.eq.s32.totalorder %s18, 0
    %p45 = por %p43, %p44
    %s47 = sadd.s32 %s46, 1
    %p50 = scmp.eq.s32.totalorder %s12, 1
    %p51 = scmp.ne.s32.totalorder %s46, %s48
    %p52 = scmp.eq.s32.totalorder %s12, 0
    %p53 = por %p51, %p52
    %p54 = scmp.ne.s32.totalorder %s46, %s48
    %p55 = scmp.eq.s32.totalorder %s17, 1
    %p56 = por %p54, %p55
    %p57 = scmp.ne.s32.totalorder %s48, %s49
    %p58 = scmp.eq.s32.totalorder %s17, 0
    %p59 = por %p57, %p58
    %p60 = scmp.ne.s32.totalorder %s48, %s49
    %p61 = scmp.eq.s32.totalorder %s18, 1
    %p62 = por %p60, %p61
    %p64 = scmp.ne.s32.totalorder %s49, %s63
    %p65 = scmp.eq.s32.totalorder %s18, 0
    %p66 = por %p64, %p65
    %s68 = sadd.s32 %s67, 1
    %p71 = scmp.eq.s32.totalorder %s12, 1
    %p72 = scmp.ne.s32.totalorder %s67, %s69
    %p73 = scmp.eq.s32.totalorder %s12, 0
    %p74 = por %p72, %p73
    %p75 = scmp.ne.s32.totalorder %s67, %s69
    %p76 = scmp.eq.s32.totalorder %s17, 1
    %p77 = por %p75, %p76
    %p78 = scmp.ne.s32.totalorder %s69, %s70
    %p79 = scmp.eq.s32.totalorder %s17, 0
    %p80 = por %p78, %p79
    %p81 = scmp.ne.s32.totalorder %s69, %s70
    %p82 = scmp.eq.s32.totalorder %s18, 1
    %p83 = por %p81, %p82
    %p85 = scmp.ne.s32.totalorder %s70, %s84
    %p86 = scmp.eq.s32.totalorder %s18, 0
    %p87 = por %p85, %p86
    %s89 = sadd.s32 %s88, 1
    %p92 = scmp.eq.s32.totalorder %s12, 1
    %p93 = scmp.ne.s32.totalorder %s88, %s90
    %p94 = scmp.eq.s32.totalorder %s12, 0
    %p95 = por %p93, %p94
    %p96 = scmp.ne.s32.totalorder %s88, %s90
    %p97 = scmp.eq.s32.totalorder %s17, 1
    %p98 = por %p96, %p97
    %p99 = scmp.ne.s32.totalorder %s90, %s91
    %p100 = scmp.eq.s32.totalorder %s17, 0
    %p101 = por %p99, %p100
    %p102 = scmp.ne.s32.totalorder %s90, %s91
    %p103 = scmp.eq.s32.totalorder %s18, 1
    %p104 = por %p102, %p103
    %p106 = scmp.ne.s32.totalorder %s91, %s105
    %p107 = scmp.eq.s32.totalorder %s18, 0
    %p108 = por %p106, %p107
    %s110 = sadd.s32 %s109, 1
    %p113 = scmp.eq.s32.totalorder %s12, 1
    %p114 = scmp.ne.s32.totalorder %s109, %s111
    %p115 = scmp.eq.s32.totalorder %s12, 0
    %p116 = por %p114, %p115
    %p117 = scmp.ne.s32.totalorder %s109, %s111
    %p118 = scmp.eq.s32.totalorder %s17, 1
    %p119 = por %p117, %p118
    %p120 = scmp.ne.s32.totalorder %s111, %s112
    %p121 = scmp.eq.s32.totalorder %s17, 0
    %p122 = por %p120, %p121
    %p123 = scmp.ne.s32.totalorder %s111, %s112
    %p124 = scmp.eq.s32.totalorder %s18, 1
    %p125 = por %p123, %p124
    %p127 = scmp.ne.s32.totalorder %s112, %s126
    %p128 = scmp.eq.s32.totalorder %s18, 0
    %p129 = por %p127, %p128
    %s131 = sadd.s32 %s130, 1
    %p134 = scmp.eq.s32.totalorder %s12, 1
    %p135 = scmp.ne.s32.totalorder %s130, %s132
    %p136 = scmp.eq.s32.totalorder %s12, 0
    %p137 = por %p135, %p136
    %p138 = scmp.ne.s32.totalorder %s130, %s132
    %p139 = scmp.eq.s32.totalorder %s17, 1
    %p140 = por %p138, %p139
    %p141 = scmp.ne.s32.totalorder %s132, %s133
    %p142 = scmp.eq.s32.totalorder %s17, 0
    %p143 = por %p141, %p142
    %p144 = scmp.ne.s32.totalorder %s132, %s133
    %p145 = scmp.eq.s32.totalorder %s18, 1
    %p146 = por %p144, %p145
    %p148 = scmp.ne.s32.totalorder %s133, %s147
    %p149 = scmp.eq.s32.totalorder %s18, 0
    %p150 = por %p148, %p149
    %s151 = ssub.s32 %s12, %s19
    %p152 = scmp.eq.s32.totalorder %s151, 0
    %s154 = sadd.s32 %s153, 1
    %s155 = scalar_select %p152, %s153, %s154
    %p158 = pneg %p152
    %p159 = scmp.eq.s32.totalorder %s12, 1
    %p160 = por %p158, %p159
    %p161 = scmp.ne.s32.totalorder %s153, %s156
    %p162 = scmp.eq.s32.totalorder %s12, 0
    %p163 = por %p161, %p162
    %p164 = scmp.ne.s32.totalorder %s153, %s156
    %p165 = scmp.eq.s32.totalorder %s17, 1
    %p166 = por %p164, %p165
    %p167 = scmp.ne.s32.totalorder %s156, %s157
    %p168 = scmp.eq.s32.totalorder %s17, 0
    %p169 = por %p167, %p168
    %p170 = scmp.ne.s32.totalorder %s156, %s157
    %p171 = scmp.eq.s32.totalorder %s18, 1
    %p172 = por %p170, %p171
    %p174 = scmp.ne.s32.totalorder %s157, %s173
    %p175 = scmp.eq.s32.totalorder %s18, 0
    %p176 = por %p174, %p175
    %p177 = scmp.le.s32.totalorder 1, %s12
    %p178 = scmp.lt.s32.totalorder %s12, 3
    %p179 = pnand %p177, %p178
    %p180 = pneg %p179
    // Predicated region
    $region9: #{net_forward.1} parent=5 // pred_check
      _
    $region10: #{net_forward.1} parent=5 // pred_check_branch
      %182 = sbr.rel (%p179) target = $region12
    $region11: #{net_forward.1} parent=5 // pred_region
      %s183 = ssub.s32 %s12, 1
      // Predicated region
      $region13: #{net_forward.1} parent=11 // pred_check
        %p184 = pneg %p59
      $region14: #{net_forward.1} parent=11 // pred_check_branch
        %186 = sbr.rel (%p184) target = $region16
      $region15: #{net_forward.1} parent=11 // pred_region
        _
      $region16: #{net_forward.1} parent=11 // pred_fallthru
        _
      // Predicated region
      $region17: #{net_forward.1} parent=11 // pred_check
        %p187 = pneg %p80
      $region18: #{net_forward.1} parent=11 // pred_check_branch
        %189 = sbr.rel (%p187) target = $region20
      $region19: #{net_forward.1} parent=11 // pred_region
        _
      $region20: #{net_forward.1} parent=11 // pred_fallthru
        _
      // Predicated region
      $region21: #{net_forward.1} parent=11 // pred_check
        %p190 = pneg %p101
      $region22: #{net_forward.1} parent=11 // pred_check_branch
        %192 = sbr.rel (%p190) target = $region24
      $region23: #{net_forward.1} parent=11 // pred_region
        _
      $region24: #{net_forward.1} parent=11 // pred_fallthru
        _
      // Predicated region
      $region25: #{net_forward.1} parent=11 // pred_check
        %p193 = pneg %p122
      $region26: #{net_forward.1} parent=11 // pred_check_branch
        %195 = sbr.rel (%p193) target = $region28
      $region27: #{net_forward.1} parent=11 // pred_region
        _
      $region28: #{net_forward.1} parent=11 // pred_fallthru
        _
      // Predicated region
      $region29: #{net_forward.1} parent=11 // pred_check
        %p196 = pneg %p143
      $region30: #{net_forward.1} parent=11 // pred_check_branch
        %198 = sbr.rel (%p196) target = $region32
      $region31: #{net_forward.1} parent=11 // pred_region
        _
      $region32: #{net_forward.1} parent=11 // pred_fallthru
        _
    $region12: #{net_forward.1} parent=5 // pred_fallthru
      _
    %p199 = scmp.lt.s32.totalorder %s12, 2
    // Predicated region
    $region33: #{net_forward.1} parent=5 // pred_check
      %p200 = pneg %p199
    $region34: #{net_forward.1} parent=5 // pred_check_branch
      %202 = sbr.rel (%p200) target = $region36
    $region35: #{net_forward.1} parent=5 // pred_region
      // Predicated region
      $region37: #{net_forward.1} parent=35 // pred_check
        %p203 = pneg %p32
      $region38: #{net_forward.1} parent=35 // pred_check_branch
        %205 = sbr.rel (%p203) target = $region40
      $region39: #{net_forward.1} parent=35 // pred_region
        %p206 = scmp.lt.s32.totalorder %s12, 1
        %s207 = scalar_select %p206, %s12, 1
        %s208 = smul.addr %s207, 6
        %s209 = scalar_lea.vmem %s0, %s208
      $region40: #{net_forward.1} parent=35 // pred_fallthru
        _
    $region36: #{net_forward.1} parent=5 // pred_fallthru
      _
    %p210 = scmp.le.s32.totalorder 1, %s12
    %p211 = scmp.lt.s32.totalorder %s12, 3
    %p212 = pnand %p210, %p211
    %p213 = pneg %p212
    // Predicated region
    $region41: #{net_forward.1} parent=5 // pred_check
      _
    $region42: #{net_forward.1} parent=5 // pred_check_branch
      %215 = sbr.rel (%p212) target = $region44
    $region43: #{net_forward.1} parent=5 // pred_region
      %s216 = ssub.s32 %s12, 1
      %p217 = scmp.lt.s32.totalorder %s17, 1
      %s218 = scalar_select %p217, %s17, 1
      %s219 = smul.addr %s218, 6
      %s220 = scalar_lea.vmem %s0, %s219
      %p221 = pneg %p38
      %p222 = pneg %p35
      %p223 = pneg %p59
      %p224 = pneg %p56
      %p225 = pneg %p80
      %p226 = pneg %p77
      %p227 = pneg %p101
      %p228 = pneg %p98
      %p229 = pneg %p122
      %p230 = pneg %p119
      %p231 = pneg %p143
      %p232 = pneg %p140
      %p233 = pneg %p169
      %p234 = pneg %p166
      %p235 = scmp.lt.s32.totalorder %s17, 1
      %s236 = scalar_select %p235, %s17, 1
      %s237 = smul.addr %s236, 12
      %s238 = smul.addr %s237, 8
      %s239 = scalar_lea.vmem %s6, %s238
      %p240 = scmp.lt.s32.totalorder %s17, 1
      %s241 = scalar_select %p240, %s17, 1
      %s242 = smul.addr %s241, 6
      %s243 = scalar_lea.vmem %s0, %s242
      %p244 = scmp.lt.s32.totalorder %s17, 1
      %s245 = scalar_select %p244, %s17, 1
      %s246 = smul.addr %s245, 12
      %s247 = smul.addr %s246, 8
      %s248 = scalar_lea.vmem %s6, %s247
      %v249 = vld [vmem:[%s243] sm:$0x3f]
      %v250 = vld [vmem:[%s1] sm:$0xff]
      %v251 = vld [vmem:[%s1 + $0x8] sm:$0x7f]
      %v252 = vld [vmem:[%s2] sm:$0xff]
      %v253 = vld [vmem:[%s2 + $0x8] sm:$0xff]
      %v254 = vld [vmem:[%s2 + $0x10] sm:$0x3]
      %v255 = vld [vmem:[%s3] sm:$0xff]
      %v256 = vld [vmem:[%s3 + $0x8] sm:$0xff]
      %v257 = vld [vmem:[%s3 + $0x10] sm:$0x3]
      %v258 = vld [vmem:[%s5] sm:$0xff]
      %v259 = vld [vmem:[%s5 + $0x8] sm:$0x7f]
      %v260 = vld [vmem:[%s5 + $0x8] sm:$0xff]
      %v261 = vld [vmem:[%s5] sm:$0x3]
      %v263 = vlaneseq
      %v264 = vshrl.u32 %v263, 7
      %v265 = vsub.s32 0, %v264
      %v266 = vrot.slane %v249, %v265
      %v267 = vlaneseq
      %v268 = vshrl.u32 %v267, 7
      %v269 = vsub.s32 1, %v268
      %v270 = vrot.slane %v249, %v269
      %v271 = vlaneseq
      %v272 = vshrl.u32 %v271, 7
      %v273 = vsub.s32 2, %v272
      %v274 = vrot.slane %v249, %v273
      %v275 = vlaneseq
      %v276 = vshrl.u32 %v275, 7
      %v277 = vsub.s32 3, %v276
      %v278 = vrot.slane %v249, %v277
      %v279 = vlaneseq
      %v280 = vshrl.u32 %v279, 7
      %v281 = vsub.s32 4, %v280
      %v282 = vrot.slane %v249, %v281
      %v283 = vlaneseq
      %v284 = vshrl.u32 %v283, 7
      %v285 = vsub.s32 5, %v284
      %v286 = vrot.slane %v249, %v285
      %293 = vrot.lane.b32.xlu0 %v266, 17
      %v294 = vpop.permute.xlu0 %293
      %295 = vrot.lane.b32.xlu0 %v270, 17
      %v296 = vpop.permute.xlu0 %295
      %297 = vrot.lane.b32.xlu0 %v274, 17
      %v298 = vpop.permute.xlu0 %297
      %299 = vrot.lane.b32.xlu0 %v278, 17
      %v300 = vpop.permute.xlu0 %299
      %301 = vrot.lane.b32.xlu0 %v282, 17
      %v302 = vpop.permute.xlu0 %301
      %303 = vrot.lane.b32.xlu0 %v286, 17
      %v304 = vpop.permute.xlu0 %303
      %v305 = vlaneseq
      %v306 = vand.u32 %v305, 127
      %vm307 = vcmp.lt.s32.totalorder %v306, 17
      %v308 = vsel %vm307, %v302, %v304
      %v309 = vsel %vm307, %v300, %v302
      %v310 = vsel %vm307, %v298, %v300
      %v311 = vsel %vm307, %v296, %v298
      %v312 = vsel %vm307, %v294, %v296
      %v313 = vsel %vm307, %v304, %v294
      %v314 = vld [vmem:[%s4] ss:$8 sm:$0xf]
      %v315 = vld [vmem:[%s4] ss:$8 sm:$0x30]
      %v316 = vor.u32 %v314, %v315
      %v318 = vlaneseq
      %v319 = vshrl.u32 %v318, 7
      %v320 = vsub.s32 0, %v319
      %v321 = vrot.slane %v316, %v320
      %v322 = vlaneseq
      %v323 = vshrl.u32 %v322, 7
      %v324 = vsub.s32 1, %v323
      %v325 = vrot.slane %v316, %v324
      %v326 = vlaneseq
      %v327 = vshrl.u32 %v326, 7
      %v328 = vsub.s32 2, %v327
      %v329 = vrot.slane %v316, %v328
      %v330 = vlaneseq
      %v331 = vshrl.u32 %v330, 7
      %v332 = vsub.s32 3, %v331
      %v333 = vrot.slane %v316, %v332
      %v334 = vlaneseq
      %v335 = vshrl.u32 %v334, 7
      %v336 = vsub.s32 4, %v335
      %v337 = vrot.slane %v316, %v336
      %v338 = vlaneseq
      %v339 = vshrl.u32 %v338, 7
      %v340 = vsub.s32 5, %v339
      %v341 = vrot.slane %v316, %v340
      %v348 = vmul.f32 %v313, %v321
      %v349 = vmul.f32 %v312, %v325
      %v350 = vmul.f32 %v311, %v329
      %v351 = vmul.f32 %v310, %v333
      %v352 = vmul.f32 %v309, %v337
      %v353 = vmul.f32 %v308, %v341
      %355 = vset.pattern.permute.xlu0 0
      %356 = vperm.xlu0 %355, %v250
      %v357 = vpop.permute.xlu0 %356
      %360 = vset.pattern.permute.xlu0 0
      %361 = vperm.xlu0 %360, %v251
      %v362 = vpop.permute.xlu0 %361
      %v364 = vlaneseq
      %v365 = vshrl.u32 %v364, 7
      %v366 = vsub.s32 0, %v365
      %v367 = vrot.slane %v348, %v366
      %v368 = vlaneseq
      %v369 = vshrl.u32 %v368, 7
      %v370 = vsub.s32 0, %v369
      %v371 = vrot.slane %v349, %v370
      %v372 = vlaneseq
      %v373 = vshrl.u32 %v372, 7
      %v374 = vsub.s32 0, %v373
      %v375 = vrot.slane %v350, %v374
      %v376 = vlaneseq
      %v377 = vshrl.u32 %v376, 7
      %v378 = vsub.s32 0, %v377
      %v379 = vrot.slane %v351, %v378
      %v380 = vlaneseq
      %v381 = vshrl.u32 %v380, 7
      %v382 = vsub.s32 0, %v381
      %v383 = vrot.slane %v352, %v382
      %v384 = vlaneseq
      %v385 = vshrl.u32 %v384, 7
      %v386 = vsub.s32 0, %v385
      %v387 = vrot.slane %v353, %v386
      %v388 = vmul.f32 %v357, %v367
      %v389 = vmul.f32 %v357, %v371
      %v390 = vmul.f32 %v357, %v375
      %v391 = vmul.f32 %v357, %v379
      %v392 = vmul.f32 %v357, %v383
      %v393 = vmul.f32 %v357, %v387
      %v394 = vmul.f32 %v362, %v367
      %v395 = vmul.f32 %v362, %v371
      %v396 = vmul.f32 %v362, %v375
      %v397 = vmul.f32 %v362, %v379
      %v398 = vmul.f32 %v362, %v383
      %v399 = vmul.f32 %v362, %v387
      %v400 = vadd.f32 %v388, 0.0
      %v401 = vadd.f32 %v389, 0.0
      %v402 = vadd.f32 %v390, 0.0
      %v403 = vadd.f32 %v391, 0.0
      %v404 = vadd.f32 %v392, 0.0
      %v405 = vadd.f32 %v393, 0.0
      %v406 = vadd.f32 %v394, 0.0
      %v407 = vadd.f32 %v395, 0.0
      %v408 = vadd.f32 %v396, 0.0
      %v409 = vadd.f32 %v397, 0.0
      %v410 = vadd.f32 %v398, 0.0
      %v411 = vadd.f32 %v399, 0.0
      %412 = vrot.lane.b32.xlu0 %v266, 16
      %v413 = vpop.permute.xlu0 %412
      %414 = vrot.lane.b32.xlu0 %v270, 16
      %v415 = vpop.permute.xlu0 %414
      %416 = vrot.lane.b32.xlu0 %v274, 16
      %v417 = vpop.permute.xlu0 %416
      %418 = vrot.lane.b32.xlu0 %v278, 16
      %v419 = vpop.permute.xlu0 %418
      %420 = vrot.lane.b32.xlu0 %v282, 16
      %v421 = vpop.permute.xlu0 %420
      %422 = vrot.lane.b32.xlu0 %v286, 16
      %v423 = vpop.permute.xlu0 %422
      %vm424 = vcmp.lt.s32.totalorder %v306, 16
      %v425 = vsel %vm424, %v421, %v423
      %v426 = vsel %vm424, %v419, %v421
      %v427 = vsel %vm424, %v417, %v419
      %v428 = vsel %vm424, %v415, %v417
      %v429 = vsel %vm424, %v413, %v415
      %v430 = vsel %vm424, %v423, %v413
      %s431 = scalar_lea.vmem %s4, 1
      %v432 = vld [vmem:[%s431] ss:$8 sm:$0xf]
      %v433 = vld [vmem:[%s431] ss:$8 sm:$0x30]
      %v434 = vor.u32 %v432, %v433
      %v436 = vlaneseq
      %v437 = vshrl.u32 %v436, 7
      %v438 = vsub.s32 0, %v437
      %v439 = vrot.slane %v434, %v438
      %v440 = vlaneseq
      %v441 = vshrl.u32 %v440, 7
      %v442 = vsub.s32 1, %v441
      %v443 = vrot.slane %v434, %v442
      %v444 = vlaneseq
      %v445 = vshrl.u32 %v444, 7
      %v446 = vsub.s32 2, %v445
      %v447 = vrot.slane %v434, %v446
      %v448 = vlaneseq
      %v449 = vshrl.u32 %v448, 7
      %v450 = vsub.s32 3, %v449
      %v451 = vrot.slane %v434, %v450
      %v452 = vlaneseq
      %v453 = vshrl.u32 %v452, 7
      %v454 = vsub.s32 4, %v453
      %v455 = vrot.slane %v434, %v454
      %v456 = vlaneseq
      %v457 = vshrl.u32 %v456, 7
      %v458 = vsub.s32 5, %v457
      %v459 = vrot.slane %v434, %v458
      %v466 = vmul.f32 %v430, %v439
      %v467 = vmul.f32 %v429, %v443
      %v468 = vmul.f32 %v428, %v447
      %v469 = vmul.f32 %v427, %v451
      %v470 = vmul.f32 %v426, %v455
      %v471 = vmul.f32 %v425, %v459
      %472 = vset.pattern.permute.xlu0 1
      %473 = vperm.xlu0 %472, %v250
      %v474 = vpop.permute.xlu0 %473
      %476 = vset.pattern.permute.xlu0 1
      %477 = vperm.xlu0 %476, %v251
      %v478 = vpop.permute.xlu0 %477
      %v480 = vlaneseq
      %v481 = vshrl.u32 %v480, 7
      %v482 = vsub.s32 0, %v481
      %v483 = vrot.slane %v466, %v482
      %v484 = vlaneseq
      %v485 = vshrl.u32 %v484, 7
      %v486 = vsub.s32 0, %v485
      %v487 = vrot.slane %v467, %v486
      %v488 = vlaneseq
      %v489 = vshrl.u32 %v488, 7
      %v490 = vsub.s32 0, %v489
      %v491 = vrot.slane %v468, %v490
      %v492 = vlaneseq
      %v493 = vshrl.u32 %v492, 7
      %v494 = vsub.s32 0, %v493
      %v495 = vrot.slane %v469, %v494
      %v496 = vlaneseq
      %v497 = vshrl.u32 %v496, 7
      %v498 = vsub.s32 0, %v497
      %v499 = vrot.slane %v470, %v498
      %v500 = vlaneseq
      %v501 = vshrl.u32 %v500, 7
      %v502 = vsub.s32 0, %v501
      %v503 = vrot.slane %v471, %v502
      %v504 = vmul.f32 %v474, %v483
      %v505 = vmul.f32 %v474, %v487
      %v506 = vmul.f32 %v474, %v491
      %v507 = vmul.f32 %v474, %v495
      %v508 = vmul.f32 %v474, %v499
      %v509 = vmul.f32 %v474, %v503
      %v510 = vmul.f32 %v478, %v483
      %v511 = vmul.f32 %v478, %v487
      %v512 = vmul.f32 %v478, %v491
      %v513 = vmul.f32 %v478, %v495
      %v514 = vmul.f32 %v478, %v499
      %v515 = vmul.f32 %v478, %v503
      %v516 = vadd.f32 %v400, %v504
      %v517 = vadd.f32 %v401, %v505
      %v518 = vadd.f32 %v402, %v506
      %v519 = vadd.f32 %v403, %v507
      %v520 = vadd.f32 %v404, %v508
      %v521 = vadd.f32 %v405, %v509
      %v522 = vadd.f32 %v406, %v510
      %v523 = vadd.f32 %v407, %v511
      %v524 = vadd.f32 %v408, %v512
      %v525 = vadd.f32 %v409, %v513
      %v526 = vadd.f32 %v410, %v514
      %v527 = vadd.f32 %v411, %v515
      %528 = vrot.lane.b32.xlu0 %v266, 15
      %v529 = vpop.permute.xlu0 %528
      %530 = vrot.lane.b32.xlu0 %v270, 15
      %v531 = vpop.permute.xlu0 %530
      %532 = vrot.lane.b32.xlu0 %v274, 15
      %v533 = vpop.permute.xlu0 %532
      %534 = vrot.lane.b32.xlu0 %v278, 15
      %v535 = vpop.permute.xlu0 %534
      %536 = vrot.lane.b32.xlu0 %v282, 15
      %v537 = vpop.permute.xlu0 %536
      %538 = vrot.lane.b32.xlu0 %v286, 15
      %v539 = vpop.permute.xlu0 %538
      %vm540 = vcmp.lt.s32.totalorder %v306, 15
      %v541 = vsel %vm540, %v537, %v539
      %v542 = vsel %vm540, %v535, %v537
      %v543 = vsel %vm540, %v533, %v535
      %v544 = vsel %vm540, %v531, %v533
      %v545 = vsel %vm540, %v529, %v531
      %v546 = vsel %vm540, %v539, %v529
      %s547 = scalar_lea.vmem %s4, 2
      %v548 = vld [vmem:[%s547] ss:$8 sm:$0xf]
      %v549 = vld [vmem:[%s547] ss:$8 sm:$0x30]
      %v550 = vor.u32 %v548, %v549
      %v552 = vlaneseq
      %v553 = vshrl.u32 %v552, 7
      %v554 = vsub.s32 0, %v553
      %v555 = vrot.slane %v550, %v554
      %v556 = vlaneseq
      %v557 = vshrl.u32 %v556, 7
      %v558 = vsub.s32 1, %v557
      %v559 = vrot.slane %v550, %v558
      %v560 = vlaneseq
      %v561 = vshrl.u32 %v560, 7
      %v562 = vsub.s32 2, %v561
      %v563 = vrot.slane %v550, %v562
      %v564 = vlaneseq
      %v565 = vshrl.u32 %v564, 7
      %v566 = vsub.s32 3, %v565
      %v567 = vrot.slane %v550, %v566
      %v568 = vlaneseq
      %v569 = vshrl.u32 %v568, 7
      %v570 = vsub.s32 4, %v569
      %v571 = vrot.slane %v550, %v570
      %v572 = vlaneseq
      %v573 = vshrl.u32 %v572, 7
      %v574 = vsub.s32 5, %v573
      %v575 = vrot.slane %v550, %v574
      %v582 = vmul.f32 %v546, %v555
      %v583 = vmul.f32 %v545, %v559
      %v584 = vmul.f32 %v544, %v563
      %v585 = vmul.f32 %v543, %v567
      %v586 = vmul.f32 %v542, %v571
      %v587 = vmul.f32 %v541, %v575
      %588 = vset.pattern.permute.xlu0 2
      %589 = vperm.xlu0 %588, %v250
      %v590 = vpop.permute.xlu0 %589
      %592 = vset.pattern.permute.xlu0 2
      %593 = vperm.xlu0 %592, %v251
      %v594 = vpop.permute.xlu0 %593
      %v596 = vlaneseq
      %v597 = vshrl.u32 %v596, 7
      %v598 = vsub.s32 0, %v597
      %v599 = vrot.slane %v582, %v598
      %v600 = vlaneseq
      %v601 = vshrl.u32 %v600, 7
      %v602 = vsub.s32 0, %v601
      %v603 = vrot.slane %v583, %v602
      %v604 = vlaneseq
      %v605 = vshrl.u32 %v604, 7
      %v606 = vsub.s32 0, %v605
      %v607 = vrot.slane %v584, %v606
      %v608 = vlaneseq
      %v609 = vshrl.u32 %v608, 7
      %v610 = vsub.s32 0, %v609
      %v611 = vrot.slane %v585, %v610
      %v612 = vlaneseq
      %v613 = vshrl.u32 %v612, 7
      %v614 = vsub.s32 0, %v613
      %v615 = vrot.slane %v586, %v614
      %v616 = vlaneseq
      %v617 = vshrl.u32 %v616, 7
      %v618 = vsub.s32 0, %v617
      %v619 = vrot.slane %v587, %v618
      %v620 = vmul.f32 %v590, %v599
      %v621 = vmul.f32 %v590, %v603
      %v622 = vmul.f32 %v590, %v607
      %v623 = vmul.f32 %v590, %v611
      %v624 = vmul.f32 %v590, %v615
      %v625 = vmul.f32 %v590, %v619
      %v626 = vmul.f32 %v594, %v599
      %v627 = vmul.f32 %v594, %v603
      %v628 = vmul.f32 %v594, %v607
      %v629 = vmul.f32 %v594, %v611
      %v630 = vmul.f32 %v594, %v615
      %v631 = vmul.f32 %v594, %v619
      %v632 = vadd.f32 %v516, %v620
      %v633 = vadd.f32 %v517, %v621
      %v634 = vadd.f32 %v518, %v622
      %v635 = vadd.f32 %v519, %v623
      %v636 = vadd.f32 %v520, %v624
      %v637 = vadd.f32 %v521, %v625
      %v638 = vadd.f32 %v522, %v626
      %v639 = vadd.f32 %v523, %v627
      %v640 = vadd.f32 %v524, %v628
      %v641 = vadd.f32 %v525, %v629
      %v642 = vadd.f32 %v526, %v630
      %v643 = vadd.f32 %v527, %v631
      %644 = vrot.lane.b32.xlu0 %v266, 1
      %v645 = vpop.permute.xlu0 %644
      %646 = vrot.lane.b32.xlu0 %v270, 1
      %v647 = vpop.permute.xlu0 %646
      %648 = vrot.lane.b32.xlu0 %v274, 1
      %v649 = vpop.permute.xlu0 %648
      %650 = vrot.lane.b32.xlu0 %v278, 1
      %v651 = vpop.permute.xlu0 %650
      %652 = vrot.lane.b32.xlu0 %v282, 1
      %v653 = vpop.permute.xlu0 %652
      %654 = vrot.lane.b32.xlu0 %v286, 1
      %v655 = vpop.permute.xlu0 %654
      %vm656 = vcmp.lt.s32.totalorder %v306, 1
      %v657 = vsel %vm656, %v653, %v655
      %v658 = vsel %vm656, %v651, %v653
      %v659 = vsel %vm656, %v649, %v651
      %v660 = vsel %vm656, %v647, %v649
      %v661 = vsel %vm656, %v645, %v647
      %v662 = vsel %vm656, %v655, %v645
      %s663 = scalar_lea.vmem %s4, 3
      %v664 = vld [vmem:[%s663] ss:$8 sm:$0xf]
      %v665 = vld [vmem:[%s663] ss:$8 sm:$0x30]
      %v666 = vor.u32 %v664, %v665
      %v668 = vlaneseq
      %v669 = vshrl.u32 %v668, 7
      %v670 = vsub.s32 0, %v669
      %v671 = vrot.slane %v666, %v670
      %v672 = vlaneseq
      %v673 = vshrl.u32 %v672, 7
      %v674 = vsub.s32 1, %v673
      %v675 = vrot.slane %v666, %v674
      %v676 = vlaneseq
      %v677 = vshrl.u32 %v676, 7
      %v678 = vsub.s32 2, %v677
      %v679 = vrot.slane %v666, %v678
      %v680 = vlaneseq
      %v681 = vshrl.u32 %v680, 7
      %v682 = vsub.s32 3, %v681
      %v683 = vrot.slane %v666, %v682
      %v684 = vlaneseq
      %v685 = vshrl.u32 %v684, 7
      %v686 = vsub.s32 4, %v685
      %v687 = vrot.slane %v666, %v686
      %v688 = vlaneseq
      %v689 = vshrl.u32 %v688, 7
      %v690 = vsub.s32 5, %v689
      %v691 = vrot.slane %v666, %v690
      %v698 = vmul.f32 %v662, %v671
      %v699 = vmul.f32 %v661, %v675
      %v700 = vmul.f32 %v660, %v679
      %v701 = vmul.f32 %v659, %v683
      %v702 = vmul.f32 %v658, %v687
      %v703 = vmul.f32 %v657, %v691
      %704 = vset.pattern.permute.xlu0 3
      %705 = vperm.xlu0 %704, %v250
      %v706 = vpop.permute.xlu0 %705
      %708 = vset.pattern.permute.xlu0 3
      %709 = vperm.xlu0 %708, %v251
      %v710 = vpop.permute.xlu0 %709
      %v712 = vlaneseq
      %v713 = vshrl.u32 %v712, 7
      %v714 = vsub.s32 0, %v713
      %v715 = vrot.slane %v698, %v714
      %v716 = vlaneseq
      %v717 = vshrl.u32 %v716, 7
      %v718 = vsub.s32 0, %v717
      %v719 = vrot.slane %v699, %v718
      %v720 = vlaneseq
      %v721 = vshrl.u32 %v720, 7
      %v722 = vsub.s32 0, %v721
      %v723 = vrot.slane %v700, %v722
      %v724 = vlaneseq
      %v725 = vshrl.u32 %v724, 7
      %v726 = vsub.s32 0, %v725
      %v727 = vrot.slane %v701, %v726
      %v728 = vlaneseq
      %v729 = vshrl.u32 %v728, 7
      %v730 = vsub.s32 0, %v729
      %v731 = vrot.slane %v702, %v730
      %v732 = vlaneseq
      %v733 = vshrl.u32 %v732, 7
      %v734 = vsub.s32 0, %v733
      %v735 = vrot.slane %v703, %v734
      %v736 = vmul.f32 %v706, %v715
      %v737 = vmul.f32 %v706, %v719
      %v738 = vmul.f32 %v706, %v723
      %v739 = vmul.f32 %v706, %v727
      %v740 = vmul.f32 %v706, %v731
      %v741 = vmul.f32 %v706, %v735
      %v742 = vmul.f32 %v710, %v715
      %v743 = vmul.f32 %v710, %v719
      %v744 = vmul.f32 %v710, %v723
      %v745 = vmul.f32 %v710, %v727
      %v746 = vmul.f32 %v710, %v731
      %v747 = vmul.f32 %v710, %v735
      %v748 = vadd.f32 %v632, %v736
      %v749 = vadd.f32 %v633, %v737
      %v750 = vadd.f32 %v634, %v738
      %v751 = vadd.f32 %v635, %v739
      %v752 = vadd.f32 %v636, %v740
      %v753 = vadd.f32 %v637, %v741
      %v754 = vadd.f32 %v638, %v742
      %v755 = vadd.f32 %v639, %v743
      %v756 = vadd.f32 %v640, %v744
      %v757 = vadd.f32 %v641, %v745
      %v758 = vadd.f32 %v642, %v746
      %v759 = vadd.f32 %v643, %v747
      %760 = vset.pattern.permute.xlu0 4
      %761 = vperm.xlu0 %760, %v250
      %v762 = vpop.permute.xlu0 %761
      %764 = vset.pattern.permute.xlu0 4
      %765 = vperm.xlu0 %764, %v251
      %v766 = vpop.permute.xlu0 %765
      %v768 = vmul.f32 %v762, %v266
      %v769 = vmul.f32 %v762, %v270
      %v770 = vmul.f32 %v762, %v274
      %v771 = vmul.f32 %v762, %v278
      %v772 = vmul.f32 %v762, %v282
      %v773 = vmul.f32 %v762, %v286
      %v774 = vmul.f32 %v766, %v266
      %v775 = vmul.f32 %v766, %v270
      %v776 = vmul.f32 %v766, %v274
      %v777 = vmul.f32 %v766, %v278
      %v778 = vmul.f32 %v766, %v282
      %v779 = vmul.f32 %v766, %v286
      %v780 = vadd.f32 %v748, %v768
      %v781 = vadd.f32 %v749, %v769
      %v782 = vadd.f32 %v750, %v770
      %v783 = vadd.f32 %v751, %v771
      %v784 = vadd.f32 %v752, %v772
      %v785 = vadd.f32 %v753, %v773
      %v786 = vadd.f32 %v754, %v774
      %v787 = vadd.f32 %v755, %v775
      %v788 = vadd.f32 %v756, %v776
      %v789 = vadd.f32 %v757, %v777
      %v790 = vadd.f32 %v758, %v778
      %v791 = vadd.f32 %v759, %v779
      %792 = vrot.lane.b32.xlu0 %v266, 127
      %v793 = vpop.permute.xlu0 %792
      %794 = vrot.lane.b32.xlu0 %v270, 127
      %v795 = vpop.permute.xlu0 %794
      %796 = vrot.lane.b32.xlu0 %v274, 127
      %v797 = vpop.permute.xlu0 %796
      %798 = vrot.lane.b32.xlu0 %v278, 127
      %v799 = vpop.permute.xlu0 %798
      %800 = vrot.lane.b32.xlu0 %v282, 127
      %v801 = vpop.permute.xlu0 %800
      %802 = vrot.lane.b32.xlu0 %v286, 127
      %v803 = vpop.permute.xlu0 %802
      %vm804 = vcmp.lt.s32.totalorder %v306, 127
      %v805 = vsel %vm804, %v801, %v803
      %v806 = vsel %vm804, %v799, %v801
      %v807 = vsel %vm804, %v797, %v799
      %v808 = vsel %vm804, %v795, %v797
      %v809 = vsel %vm804, %v793, %v795
      %v810 = vsel %vm804, %v803, %v793
      %s811 = scalar_lea.vmem %s4, 5
      %v812 = vld [vmem:[%s811] ss:$8 sm:$0xf]
      %v813 = vld [vmem:[%s811] ss:$8 sm:$0x30]
      %v814 = vor.u32 %v812, %v813
      %v816 = vlaneseq
      %v817 = vshrl.u32 %v816, 7
      %v818 = vsub.s32 0, %v817
      %v819 = vrot.slane %v814, %v818
      %v820 = vlaneseq
      %v821 = vshrl.u32 %v820, 7
      %v822 = vsub.s32 1, %v821
      %v823 = vrot.slane %v814, %v822
      %v824 = vlaneseq
      %v825 = vshrl.u32 %v824, 7
      %v826 = vsub.s32 2, %v825
      %v827 = vrot.slane %v814, %v826
      %v828 = vlaneseq
      %v829 = vshrl.u32 %v828, 7
      %v830 = vsub.s32 3, %v829
      %v831 = vrot.slane %v814, %v830
      %v832 = vlaneseq
      %v833 = vshrl.u32 %v832, 7
      %v834 = vsub.s32 4, %v833
      %v835 = vrot.slane %v814, %v834
      %v836 = vlaneseq
      %v837 = vshrl.u32 %v836, 7
      %v838 = vsub.s32 5, %v837
      %v839 = vrot.slane %v814, %v838
      %v846 = vmul.f32 %v809, %v819
      %v847 = vmul.f32 %v808, %v823
      %v848 = vmul.f32 %v807, %v827
      %v849 = vmul.f32 %v806, %v831
      %v850 = vmul.f32 %v805, %v835
      %v851 = vmul.f32 %v810, %v839
      %852 = vset.pattern.permute.xlu0 5
      %853 = vperm.xlu0 %852, %v250
      %v854 = vpop.permute.xlu0 %853
      %856 = vset.pattern.permute.xlu0 5
      %857 = vperm.xlu0 %856, %v251
      %v858 = vpop.permute.xlu0 %857
      %v860 = vlaneseq
      %v861 = vshrl.u32 %v860, 7
      %v862 = vsub.s32 0, %v861
      %v863 = vrot.slane %v846, %v862
      %v864 = vlaneseq
      %v865 = vshrl.u32 %v864, 7
      %v866 = vsub.s32 0, %v865
      %v867 = vrot.slane %v847, %v866
      %v868 = vlaneseq
      %v869 = vshrl.u32 %v868, 7
      %v870 = vsub.s32 0, %v869
      %v871 = vrot.slane %v848, %v870
      %v872 = vlaneseq
      %v873 = vshrl.u32 %v872, 7
      %v874 = vsub.s32 0, %v873
      %v875 = vrot.slane %v849, %v874
      %v876 = vlaneseq
      %v877 = vshrl.u32 %v876, 7
      %v878 = vsub.s32 0, %v877
      %v879 = vrot.slane %v850, %v878
      %v880 = vlaneseq
      %v881 = vshrl.u32 %v880, 7
      %v882 = vsub.s32 0, %v881
      %v883 = vrot.slane %v851, %v882
      %v884 = vmul.f32 %v854, %v863
      %v885 = vmul.f32 %v854, %v867
      %v886 = vmul.f32 %v854, %v871
      %v887 = vmul.f32 %v854, %v875
      %v888 = vmul.f32 %v854, %v879
      %v889 = vmul.f32 %v854, %v883
      %v890 = vmul.f32 %v858, %v863
      %v891 = vmul.f32 %v858, %v867
      %v892 = vmul.f32 %v858, %v871
      %v893 = vmul.f32 %v858, %v875
      %v894 = vmul.f32 %v858, %v879
      %v895 = vmul.f32 %v858, %v883
      %v896 = vadd.f32 %v780, %v884
      %v897 = vadd.f32 %v781, %v885
      %v898 = vadd.f32 %v782, %v886
      %v899 = vadd.f32 %v783, %v887
      %v900 = vadd.f32 %v784, %v888
      %v901 = vadd.f32 %v785, %v889
      %v902 = vadd.f32 %v786, %v890
      %v903 = vadd.f32 %v787, %v891
      %v904 = vadd.f32 %v788, %v892
      %v905 = vadd.f32 %v789, %v893
      %v906 = vadd.f32 %v790, %v894
      %v907 = vadd.f32 %v791, %v895
      %908 = vrot.lane.b32.xlu0 %v266, 113
      %v909 = vpop.permute.xlu0 %908
      %910 = vrot.lane.b32.xlu0 %v270, 113
      %v911 = vpop.permute.xlu0 %910
      %912 = vrot.lane.b32.xlu0 %v274, 113
      %v913 = vpop.permute.xlu0 %912
      %914 = vrot.lane.b32.xlu0 %v278, 113
      %v915 = vpop.permute.xlu0 %914
      %916 = vrot.lane.b32.xlu0 %v282, 113
      %v917 = vpop.permute.xlu0 %916
      %918 = vrot.lane.b32.xlu0 %v286, 113
      %v919 = vpop.permute.xlu0 %918
      %vm920 = vcmp.lt.s32.totalorder %v306, 113
      %v921 = vsel %vm920, %v917, %v919
      %v922 = vsel %vm920, %v915, %v917
      %v923 = vsel %vm920, %v913, %v915
      %v924 = vsel %vm920, %v911, %v913
      %v925 = vsel %vm920, %v909, %v911
      %v926 = vsel %vm920, %v919, %v909
      %s927 = scalar_lea.vmem %s4, 6
      %v928 = vld [vmem:[%s927] ss:$8 sm:$0xf]
      %v929 = vld [vmem:[%s927] ss:$8 sm:$0x30]
      %v930 = vor.u32 %v928, %v929
      %v932 = vlaneseq
      %v933 = vshrl.u32 %v932, 7
      %v934 = vsub.s32 0, %v933
      %v935 = vrot.slane %v930, %v934
      %v936 = vlaneseq
      %v937 = vshrl.u32 %v936, 7
      %v938 = vsub.s32 1, %v937
      %v939 = vrot.slane %v930, %v938
      %v940 = vlaneseq
      %v941 = vshrl.u32 %v940, 7
      %v942 = vsub.s32 2, %v941
      %v943 = vrot.slane %v930, %v942
      %v944 = vlaneseq
      %v945 = vshrl.u32 %v944, 7
      %v946 = vsub.s32 3, %v945
      %v947 = vrot.slane %v930, %v946
      %v948 = vlaneseq
      %v949 = vshrl.u32 %v948, 7
      %v950 = vsub.s32 4, %v949
      %v951 = vrot.slane %v930, %v950
      %v952 = vlaneseq
      %v953 = vshrl.u32 %v952, 7
      %v954 = vsub.s32 5, %v953
      %v955 = vrot.slane %v930, %v954
      %v962 = vmul.f32 %v925, %v935
      %v963 = vmul.f32 %v924, %v939
      %v964 = vmul.f32 %v923, %v943
      %v965 = vmul.f32 %v922, %v947
      %v966 = vmul.f32 %v921, %v951
      %v967 = vmul.f32 %v926, %v955
      %968 = vset.pattern.permute.xlu0 6
      %969 = vperm.xlu0 %968, %v250
      %v970 = vpop.permute.xlu0 %969
      %972 = vset.pattern.permute.xlu0 6
      %973 = vperm.xlu0 %972, %v251
      %v974 = vpop.permute.xlu0 %973
      %v976 = vlaneseq
      %v977 = vshrl.u32 %v976, 7
      %v978 = vsub.s32 0, %v977
      %v979 = vrot.slane %v962, %v978
      %v980 = vlaneseq
      %v981 = vshrl.u32 %v980, 7
      %v982 = vsub.s32 0, %v981
      %v983 = vrot.slane %v963, %v982
      %v984 = vlaneseq
      %v985 = vshrl.u32 %v984, 7
      %v986 = vsub.s32 0, %v985
      %v987 = vrot.slane %v964, %v986
      %v988 = vlaneseq
      %v989 = vshrl.u32 %v988, 7
      %v990 = vsub.s32 0, %v989
      %v991 = vrot.slane %v965, %v990
      %v992 = vlaneseq
      %v993 = vshrl.u32 %v992, 7
      %v994 = vsub.s32 0, %v993
      %v995 = vrot.slane %v966, %v994
      %v996 = vlaneseq
      %v997 = vshrl.u32 %v996, 7
      %v998 = vsub.s32 0, %v997
      %v999 = vrot.slane %v967, %v998
      %v1000 = vmul.f32 %v970, %v979
      %v1001 = vmul.f32 %v970, %v983
      %v1002 = vmul.f32 %v970, %v987
      %v1003 = vmul.f32 %v970, %v991
      %v1004 = vmul.f32 %v970, %v995
      %v1005 = vmul.f32 %v970, %v999
      %v1006 = vmul.f32 %v974, %v979
      %v1007 = vmul.f32 %v974, %v983
      %v1008 = vmul.f32 %v974, %v987
      %v1009 = vmul.f32 %v974, %v991
      %v1010 = vmul.f32 %v974, %v995
      %v1011 = vmul.f32 %v974, %v999
      %v1012 = vadd.f32 %v896, %v1000
      %v1013 = vadd.f32 %v897, %v1001
      %v1014 = vadd.f32 %v898, %v1002
      %v1015 = vadd.f32 %v899, %v1003
      %v1016 = vadd.f32 %v900, %v1004
      %v1017 = vadd.f32 %v901, %v1005
      %v1018 = vadd.f32 %v902, %v1006
      %v1019 = vadd.f32 %v903, %v1007
      %v1020 = vadd.f32 %v904, %v1008
      %v1021 = vadd.f32 %v905, %v1009
      %v1022 = vadd.f32 %v906, %v1010
      %v1023 = vadd.f32 %v907, %v1011
      %1024 = vrot.lane.b32.xlu0 %v266, 112
      %v1025 = vpop.permute.xlu0 %1024
      %1026 = vrot.lane.b32.xlu0 %v270, 112
      %v1027 = vpop.permute.xlu0 %1026
      %1028 = vrot.lane.b32.xlu0 %v274, 112
      %v1029 = vpop.permute.xlu0 %1028
      %1030 = vrot.lane.b32.xlu0 %v278, 112
      %v1031 = vpop.permute.xlu0 %1030
      %1032 = vrot.lane.b32.xlu0 %v282, 112
      %v1033 = vpop.permute.xlu0 %1032
      %1034 = vrot.lane.b32.xlu0 %v286, 112
      %v1035 = vpop.permute.xlu0 %1034
      %vm1036 = vcmp.lt.s32.totalorder %v306, 112
      %v1037 = vsel %vm1036, %v1033, %v1035
      %v1038 = vsel %vm1036, %v1031, %v1033
      %v1039 = vsel %vm1036, %v1029, %v1031
      %v1040 = vsel %vm1036, %v1027, %v1029
      %v1041 = vsel %vm1036, %v1025, %v1027
      %v1042 = vsel %vm1036, %v1035, %v1025
      %s1043 = scalar_lea.vmem %s4, 7
      %v1044 = vld [vmem:[%s1043] ss:$8 sm:$0xf]
      %v1045 = vld [vmem:[%s1043] ss:$8 sm:$0x30]
      %v1046 = vor.u32 %v1044, %v1045
      %v1048 = vlaneseq
      %v1049 = vshrl.u32 %v1048, 7
      %v1050 = vsub.s32 0, %v1049
      %v1051 = vrot.slane %v1046, %v1050
      %v1052 = vlaneseq
      %v1053 = vshrl.u32 %v1052, 7
      %v1054 = vsub.s32 1, %v1053
      %v1055 = vrot.slane %v1046, %v1054
      %v1056 = vlaneseq
      %v1057 = vshrl.u32 %v1056, 7
      %v1058 = vsub.s32 2, %v1057
      %v1059 = vrot.slane %v1046, %v1058
      %v1060 = vlaneseq
      %v1061 = vshrl.u32 %v1060, 7
      %v1062 = vsub.s32 3, %v1061
      %v1063 = vrot.slane %v1046, %v1062
      %v1064 = vlaneseq
      %v1065 = vshrl.u32 %v1064, 7
      %v1066 = vsub.s32 4, %v1065
      %v1067 = vrot.slane %v1046, %v1066
      %v1068 = vlaneseq
      %v1069 = vshrl.u32 %v1068, 7
      %v1070 = vsub.s32 5, %v1069
      %v1071 = vrot.slane %v1046, %v1070
      %v1078 = vmul.f32 %v1041, %v1051
      %v1079 = vmul.f32 %v1040, %v1055
      %v1080 = vmul.f32 %v1039, %v1059
      %v1081 = vmul.f32 %v1038, %v1063
      %v1082 = vmul.f32 %v1037, %v1067
      %v1083 = vmul.f32 %v1042, %v1071
      %1084 = vset.pattern.permute.xlu0 7
      %1085 = vperm.xlu0 %1084, %v250
      %v1086 = vpop.permute.xlu0 %1085
      %1088 = vset.pattern.permute.xlu0 7
      %1089 = vperm.xlu0 %1088, %v251
      %v1090 = vpop.permute.xlu0 %1089
      %v1092 = vlaneseq
      %v1093 = vshrl.u32 %v1092, 7
      %v1094 = vsub.s32 0, %v1093
      %v1095 = vrot.slane %v1078, %v1094
      %v1096 = vlaneseq
      %v1097 = vshrl.u32 %v1096, 7
      %v1098 = vsub.s32 0, %v1097
      %v1099 = vrot.slane %v1079, %v1098
      %v1100 = vlaneseq
      %v1101 = vshrl.u32 %v1100, 7
      %v1102 = vsub.s32 0, %v1101
      %v1103 = vrot.slane %v1080, %v1102
      %v1104 = vlaneseq
      %v1105 = vshrl.u32 %v1104, 7
      %v1106 = vsub.s32 0, %v1105
      %v1107 = vrot.slane %v1081, %v1106
      %v1108 = vlaneseq
      %v1109 = vshrl.u32 %v1108, 7
      %v1110 = vsub.s32 0, %v1109
      %v1111 = vrot.slane %v1082, %v1110
      %v1112 = vlaneseq
      %v1113 = vshrl.u32 %v1112, 7
      %v1114 = vsub.s32 0, %v1113
      %v1115 = vrot.slane %v1083, %v1114
      %v1116 = vmul.f32 %v1086, %v1095
      %v1117 = vmul.f32 %v1086, %v1099
      %v1118 = vmul.f32 %v1086, %v1103
      %v1119 = vmul.f32 %v1086, %v1107
      %v1120 = vmul.f32 %v1086, %v1111
      %v1121 = vmul.f32 %v1086, %v1115
      %v1122 = vmul.f32 %v1090, %v1095
      %v1123 = vmul.f32 %v1090, %v1099
      %v1124 = vmul.f32 %v1090, %v1103
      %v1125 = vmul.f32 %v1090, %v1107
      %v1126 = vmul.f32 %v1090, %v1111
      %v1127 = vmul.f32 %v1090, %v1115
      %v1128 = vadd.f32 %v1012, %v1116
      %v1129 = vadd.f32 %v1013, %v1117
      %v1130 = vadd.f32 %v1014, %v1118
      %v1131 = vadd.f32 %v1015, %v1119
      %v1132 = vadd.f32 %v1016, %v1120
      %v1133 = vadd.f32 %v1017, %v1121
      %v1134 = vadd.f32 %v1018, %v1122
      %v1135 = vadd.f32 %v1019, %v1123
      %v1136 = vadd.f32 %v1020, %v1124
      %v1137 = vadd.f32 %v1021, %v1125
      %v1138 = vadd.f32 %v1022, %v1126
      %v1139 = vadd.f32 %v1023, %v1127
      %1140 = vrot.lane.b32.xlu0 %v266, 111
      %v1141 = vpop.permute.xlu0 %1140
      %1142 = vrot.lane.b32.xlu0 %v270, 111
      %v1143 = vpop.permute.xlu0 %1142
      %1144 = vrot.lane.b32.xlu0 %v274, 111
      %v1145 = vpop.permute.xlu0 %1144
      %1146 = vrot.lane.b32.xlu0 %v278, 111
      %v1147 = vpop.permute.xlu0 %1146
      %1148 = vrot.lane.b32.xlu0 %v282, 111
      %v1149 = vpop.permute.xlu0 %1148
      %1150 = vrot.lane.b32.xlu0 %v286, 111
      %v1151 = vpop.permute.xlu0 %1150
      %vm1152 = vcmp.lt.s32.totalorder %v306, 111
      %v1153 = vsel %vm1152, %v1149, %v1151
      %v1154 = vsel %vm1152, %v1147, %v1149
      %v1155 = vsel %vm1152, %v1145, %v1147
      %v1156 = vsel %vm1152, %v1143, %v1145
      %v1157 = vsel %vm1152, %v1141, %v1143
      %v1158 = vsel %vm1152, %v1151, %v1141
      %s1159 = scalar_lea.vmem %s4, 48
      %v1160 = vld [vmem:[%s1159] ss:$8 sm:$0xf]
      %v1161 = vld [vmem:[%s1159] ss:$8 sm:$0x30]
      %v1162 = vor.u32 %v1160, %v1161
      %v1164 = vlaneseq
      %v1165 = vshrl.u32 %v1164, 7
      %v1166 = vsub.s32 0, %v1165
      %v1167 = vrot.slane %v1162, %v1166
      %v1168 = vlaneseq
      %v1169 = vshrl.u32 %v1168, 7
      %v1170 = vsub.s32 1, %v1169
      %v1171 = vrot.slane %v1162, %v1170
      %v1172 = vlaneseq
      %v1173 = vshrl.u32 %v1172, 7
      %v1174 = vsub.s32 2, %v1173
      %v1175 = vrot.slane %v1162, %v1174
      %v1176 = vlaneseq
      %v1177 = vshrl.u32 %v1176, 7
      %v1178 = vsub.s32 3, %v1177
      %v1179 = vrot.slane %v1162, %v1178
      %v1180 = vlaneseq
      %v1181 = vshrl.u32 %v1180, 7
      %v1182 = vsub.s32 4, %v1181
      %v1183 = vrot.slane %v1162, %v1182
      %v1184 = vlaneseq
      %v1185 = vshrl.u32 %v1184, 7
      %v1186 = vsub.s32 5, %v1185
      %v1187 = vrot.slane %v1162, %v1186
      %v1194 = vmul.f32 %v1157, %v1167
      %v1195 = vmul.f32 %v1156, %v1171
      %v1196 = vmul.f32 %v1155, %v1175
      %v1197 = vmul.f32 %v1154, %v1179
      %v1198 = vmul.f32 %v1153, %v1183
      %v1199 = vmul.f32 %v1158, %v1187
      %1200 = vset.pattern.permute.xlu0 8
      %1201 = vperm.xlu0 %1200, %v250
      %v1202 = vpop.permute.xlu0 %1201
      %1204 = vset.pattern.permute.xlu0 8
      %1205 = vperm.xlu0 %1204, %v251
      %v1206 = vpop.permute.xlu0 %1205
      %v1208 = vlaneseq
      %v1209 = vshrl.u32 %v1208, 7
      %v1210 = vsub.s32 0, %v1209
      %v1211 = vrot.slane %v1194, %v1210
      %v1212 = vlaneseq
      %v1213 = vshrl.u32 %v1212, 7
      %v1214 = vsub.s32 0, %v1213
      %v1215 = vrot.slane %v1195, %v1214
      %v1216 = vlaneseq
      %v1217 = vshrl.u32 %v1216, 7
      %v1218 = vsub.s32 0, %v1217
      %v1219 = vrot.slane %v1196, %v1218
      %v1220 = vlaneseq
      %v1221 = vshrl.u32 %v1220, 7
      %v1222 = vsub.s32 0, %v1221
      %v1223 = vrot.slane %v1197, %v1222
      %v1224 = vlaneseq
      %v1225 = vshrl.u32 %v1224, 7
      %v1226 = vsub.s32 0, %v1225
      %v1227 = vrot.slane %v1198, %v1226
      %v1228 = vlaneseq
      %v1229 = vshrl.u32 %v1228, 7
      %v1230 = vsub.s32 0, %v1229
      %v1231 = vrot.slane %v1199, %v1230
      %v1232 = vmul.f32 %v1202, %v1211
      %v1233 = vmul.f32 %v1202, %v1215
      %v1234 = vmul.f32 %v1202, %v1219
      %v1235 = vmul.f32 %v1202, %v1223
      %v1236 = vmul.f32 %v1202, %v1227
      %v1237 = vmul.f32 %v1202, %v1231
      %v1238 = vmul.f32 %v1206, %v1211
      %v1239 = vmul.f32 %v1206, %v1215
      %v1240 = vmul.f32 %v1206, %v1219
      %v1241 = vmul.f32 %v1206, %v1223
      %v1242 = vmul.f32 %v1206, %v1227
      %v1243 = vmul.f32 %v1206, %v1231
      %v1244 = vadd.f32 %v1128, %v1232
      %v1245 = vadd.f32 %v1129, %v1233
      %v1246 = vadd.f32 %v1130, %v1234
      %v1247 = vadd.f32 %v1131, %v1235
      %v1248 = vadd.f32 %v1132, %v1236
      %v1249 = vadd.f32 %v1133, %v1237
      %v1250 = vadd.f32 %v1134, %v1238
      %v1251 = vadd.f32 %v1135, %v1239
      %v1252 = vadd.f32 %v1136, %v1240
      %v1253 = vadd.f32 %v1137, %v1241
      %v1254 = vadd.f32 %v1138, %v1242
      %v1255 = vadd.f32 %v1139, %v1243
      %1257 = vset.pattern.permute.xlu0 0
      %1258 = vperm.xlu0 %1257, %v258
      %v1259 = vpop.permute.xlu0 %1258
      %1262 = vset.pattern.permute.xlu0 0
      %1263 = vperm.xlu0 %1262, %v259
      %v1264 = vpop.permute.xlu0 %1263
      %v1266 = vadd.f32 %v1244, %v1259
      %v1267 = vadd.f32 %v1245, %v1259
      %v1268 = vadd.f32 %v1246, %v1259
      %v1269 = vadd.f32 %v1247, %v1259
      %v1270 = vadd.f32 %v1248, %v1259
      %v1271 = vadd.f32 %v1249, %v1259
      %v1272 = vadd.f32 %v1250, %v1264
      %v1273 = vadd.f32 %v1251, %v1264
      %v1274 = vadd.f32 %v1252, %v1264
      %v1275 = vadd.f32 %v1253, %v1264
      %v1276 = vadd.f32 %v1254, %v1264
      %v1277 = vadd.f32 %v1255, %v1264
      %vm1278 = vcmp.ge.f32.partialorder %v1266, 0.0
      %vm1279 = vcmp.ge.f32.partialorder %v1267, 0.0
      %vm1280 = vcmp.ge.f32.partialorder %v1268, 0.0
      %vm1281 = vcmp.ge.f32.partialorder %v1269, 0.0
      %vm1282 = vcmp.ge.f32.partialorder %v1270, 0.0
      %vm1283 = vcmp.ge.f32.partialorder %v1271, 0.0
      %vm1284 = vcmp.ge.f32.partialorder %v1272, 0.0
      %vm1285 = vcmp.ge.f32.partialorder %v1273, 0.0
      %vm1286 = vcmp.ge.f32.partialorder %v1274, 0.0
      %vm1287 = vcmp.ge.f32.partialorder %v1275, 0.0
      %vm1288 = vcmp.ge.f32.partialorder %v1276, 0.0
      %vm1289 = vcmp.ge.f32.partialorder %v1277, 0.0
      %v1290 = vmul.f32 %v1266, 0.1
      %v1291 = vmul.f32 %v1267, 0.1
      %v1292 = vmul.f32 %v1268, 0.1
      %v1293 = vmul.f32 %v1269, 0.1
      %v1294 = vmul.f32 %v1270, 0.1
      %v1295 = vmul.f32 %v1271, 0.1
      %v1296 = vmul.f32 %v1272, 0.1
      %v1297 = vmul.f32 %v1273, 0.1
      %v1298 = vmul.f32 %v1274, 0.1
      %v1299 = vmul.f32 %v1275, 0.1
      %v1300 = vmul.f32 %v1276, 0.1
      %v1301 = vmul.f32 %v1277, 0.1
      %v1302 = vsel %vm1278, %v1266, %v1290
      %v1303 = vsel %vm1279, %v1267, %v1291
      %v1304 = vsel %vm1280, %v1268, %v1292
      %v1305 = vsel %vm1281, %v1269, %v1293
      %v1306 = vsel %vm1282, %v1270, %v1294
      %v1307 = vsel %vm1283, %v1271, %v1295
      %v1308 = vsel %vm1284, %v1272, %v1296
      %v1309 = vsel %vm1285, %v1273, %v1297
      %v1310 = vsel %vm1286, %v1274, %v1298
      %v1311 = vsel %vm1287, %v1275, %v1299
      %v1312 = vsel %vm1288, %v1276, %v1300
      %v1313 = vsel %vm1289, %v1277, %v1301
      %vm1322 = vcmask 1040384
      %v1323 = vrot.slane %v1302, 7
      %v1324 = vrot.slane %v1303, 7
      %v1325 = vrot.slane %v1304, 7
      %v1326 = vrot.slane %v1305, 7
      %v1327 = vrot.slane %v1308, 7
      %v1328 = vsel %vm1322, %v1323, %v1327
      %v1329 = vrot.slane %v1309, 7
      %v1330 = vsel %vm1322, %v1324, %v1329
      %v1331 = vrot.slane %v1310, 7
      %v1332 = vsel %vm1322, %v1325, %v1331
      %v1333 = vrot.slane %v1311, 7
      %v1334 = vsel %vm1322, %v1326, %v1333
      %v1343 = vsel %vm1322, %v266, %v1323
      %v1344 = vsel %vm1322, %v270, %v1324
      %v1345 = vsel %vm1322, %v274, %v1325
      %v1346 = vsel %vm1322, %v278, %v1326
      %v1351 = vrot.slane %v1306, 7
      %v1352 = vrot.slane %v1307, 7
      %v1353 = vrot.slane %v1312, 7
      %v1354 = vsel %vm1322, %v1351, %v1353
      %v1355 = vrot.slane %v1313, 7
      %v1356 = vsel %vm1322, %v1352, %v1355
      %v1361 = vsel %vm1322, %v282, %v1351
      %v1362 = vsel %vm1322, %v286, %v1352
      %vm1363 = vcmask 130048
      %v1365 = vsel %vm1363, %v252, 0
      %v1368 = vsel %vm1363, %v253, 0
      %v1371 = vsel %vm1363, %v254, 0
      %1373 = vmatprep.subr.mxu0 %v1344
      %1374 = vmatpush1.msra.mxu0 %v1343
      %1375 = vmatprep.subr.mxu0 %v1330
      %1376 = vmatpush1.msra.mxu0 %v1328
      %1377 = vmatprep.subr.mxu0 0.0
      %1378 = vmatpush1.msra.mxu0 0.0
      %1379 = vmatprep.subr.mxu0 0.0
      %1380 = vmatpush1.msra.mxu0 0.0
      %1381 = vmatprep.subr.mxu0 0.0
      %1382 = vmatpush1.msra.mxu0 0.0
      %1383 = vmatprep.subr.mxu0 0.0
      %1384 = vmatpush1.msra.mxu0 0.0
      %1385 = vmatprep.subr.mxu0 0.0
      %1386 = vmatpush1.msra.mxu0 0.0
      %1387 = vmatprep.subr.mxu0 0.0
      %1388 = vmatpush1.msra.mxu0 0.0
      %1389 = vmatprep.subr.mxu0 0.0
      %1390 = vmatpush1.msra.mxu0 0.0
      %1391 = vmatprep.subr.mxu0 0.0
      %1392 = vmatpush1.msra.mxu0 0.0
      %1393 = vmatprep.subr.mxu0 0.0
      %1394 = vmatpush1.msra.mxu0 0.0
      %1395 = vmatprep.subr.mxu0 0.0
      %1396 = vmatpush1.msra.mxu0 0.0
      %1397 = vmatprep.subr.mxu0 0.0
      %1398 = vmatpush1.msra.mxu0 0.0
      %1399 = vmatprep.subr.mxu0 0.0
      %1400 = vmatpush1.msra.mxu0 0.0
      %1401 = vmatprep.subr.mxu0 0.0
      %1402 = vmatpush1.msra.mxu0 0.0
      %1403 = vmatprep.subr.mxu0 0.0
      %1404 = vmatpush1.msra.mxu0 0.0
      %1405 = vmatprep.subr.mxu0 0.0
      %1406 = vmatpush1.msra.mxu0 0.0
      %1407 = vmatprep.subr.mxu0 0.0
      %1408 = vmatpush1.msra.mxu0 0.0
      %1409 = vmatprep.subr.mxu0 0.0
      %1410 = vmatpush1.msra.mxu0 0.0
      %1411 = vmatprep.subr.mxu0 0.0
      %1412 = vmatpush1.msra.mxu0 0.0
      %1413 = vmatprep.subr.mxu0 0.0
      %1414 = vmatpush1.msra.mxu0 0.0
      %1415 = vmatprep.subr.mxu0 0.0
      %1416 = vmatpush1.msra.mxu0 0.0
      %1417 = vmatprep.subr.mxu0 0.0
      %1418 = vmatpush1.msra.mxu0 0.0
      %1419 = vmatprep.subr.mxu0 0.0
      %1420 = vmatpush1.msra.mxu0 0.0
      %1421 = vmatprep.subr.mxu0 0.0
      %1422 = vmatpush1.msra.mxu0 0.0
      %1423 = vmatprep.subr.mxu0 0.0
      %1424 = vmatpush1.msra.mxu0 0.0
      %1425 = vmatprep.subr.mxu0 0.0
      %1426 = vmatpush1.msra.mxu0 0.0
      %1427 = vmatprep.subr.mxu0 0.0
      %1428 = vmatpush1.msra.mxu0 0.0
      %1429 = vmatprep.subr.mxu0 0.0
      %1430 = vmatpush1.msra.mxu0 0.0
      %1431 = vmatprep.subr.mxu0 0.0
      %1432 = vmatpush1.msra.mxu0 0.0
      %1433 = vmatprep.subr.mxu0 0.0
      %1434 = vmatpush1.msra.mxu0 0.0
      %1435 = vmatprep.subr.mxu0 0.0
      %1436 = vmatpush1.msra.mxu0 0.0
      %1437 = vmatprep.mubr.f32.mxu0 0.0
      %1438 = vmatmul.mubr.f32.gmra.mrb[0].mxu0 %v1365
      %v1439 = vpop.f32.mrb[0].mxu0
      %v1440 = vadd.f32 0.0, %v1439
      %v1441 = vpop.f32.mrb[0].mxu0
      %v1442 = vadd.f32 0.0, %v1441
      %1443 = vmatprep.mubr.f32.mxu0 0.0
      %1444 = vmatmul.mubr.f32.gmra.mrb[0].mxu0 %v1368
      %v1445 = vpop.f32.mrb[0].mxu0
      %v1446 = vadd.f32 0.0, %v1445
      %v1447 = vpop.f32.mrb[0].mxu0
      %v1448 = vadd.f32 0.0, %v1447
      %1449 = vmatprep.mubr.f32.mxu0 0.0
      %1450 = vmatmul.mubr.f32.gmra.mrb[0].mxu0 %v1371
      %v1451 = vpop.f32.mrb[0].mxu0
      %v1452 = vadd.f32 0.0, %v1451
      %v1453 = vpop.f32.mrb[0].mxu0
      %v1454 = vadd.f32 0.0, %v1453
      %1455 = vdwg.mxu0
      %1456 = vmatprep.subr.mxu0 %v1346
      %1457 = vmatpush1.msra.mxu0 %v1345
      %1458 = vmatprep.subr.mxu0 %v1334
      %1459 = vmatpush1.msra.mxu0 %v1332
      %1460 = vmatprep.subr.mxu0 0.0
      %1461 = vmatpush1.msra.mxu0 0.0
      %1462 = vmatprep.subr.mxu0 0.0
      %1463 = vmatpush1.msra.mxu0 0.0
      %1464 = vmatprep.subr.mxu0 0.0
      %1465 = vmatpush1.msra.mxu0 0.0
      %1466 = vmatprep.subr.mxu0 0.0
      %1467 = vmatpush1.msra.mxu0 0.0
      %1468 = vmatprep.subr.mxu0 0.0
      %1469 = vmatpush1.msra.mxu0 0.0
      %1470 = vmatprep.subr.mxu0 0.0
      %1471 = vmatpush1.msra.mxu0 0.0
      %1472 = vmatprep.subr.mxu0 0.0
      %1473 = vmatpush1.msra.mxu0 0.0
      %1474 = vmatprep.subr.mxu0 0.0
      %1475 = vmatpush1.msra.mxu0 0.0
      %1476 = vmatprep.subr.mxu0 0.0
      %1477 = vmatpush1.msra.mxu0 0.0
      %1478 = vmatprep.subr.mxu0 0.0
      %1479 = vmatpush1.msra.mxu0 0.0
      %1480 = vmatprep.subr.mxu0 0.0
      %1481 = vmatpush1.msra.mxu0 0.0
      %1482 = vmatprep.subr.mxu0 0.0
      %1483 = vmatpush1.msra.mxu0 0.0
      %1484 = vmatprep.subr.mxu0 0.0
      %1485 = vmatpush1.msra.mxu0 0.0
      %1486 = vmatprep.subr.mxu0 0.0
      %1487 = vmatpush1.msra.mxu0 0.0
      %1488 = vmatprep.subr.mxu0 0.0
      %1489 = vmatpush1.msra.mxu0 0.0
      %1490 = vmatprep.subr.mxu0 0.0
      %1491 = vmatpush1.msra.mxu0 0.0
      %1492 = vmatprep.subr.mxu0 0.0
      %1493 = vmatpush1.msra.mxu0 0.0
      %1494 = vmatprep.subr.mxu0 0.0
      %1495 = vmatpush1.msra.mxu0 0.0
      %1496 = vmatprep.subr.mxu0 0.0
      %1497 = vmatpush1.msra.mxu0 0.0
      %1498 = vmatprep.subr.mxu0 0.0
      %1499 = vmatpush1.msra.mxu0 0.0
      %1500 = vmatprep.subr.mxu0 0.0
      %1501 = vmatpush1.msra.mxu0 0.0
      %1502 = vmatprep.subr.mxu0 0.0
      %1503 = vmatpush1.msra.mxu0 0.0
      %1504 = vmatprep.subr.mxu0 0.0
      %1505 = vmatpush1.msra.mxu0 0.0
      %1506 = vmatprep.subr.mxu0 0.0
      %1507 = vmatpush1.msra.mxu0 0.0
      %1508 = vmatprep.subr.mxu0 0.0
      %1509 = vmatpush1.msra.mxu0 0.0
      %1510 = vmatprep.subr.mxu0 0.0
      %1511 = vmatpush1.msra.mxu0 0.0
      %1512 = vmatprep.subr.mxu0 0.0
      %1513 = vmatpush1.msra.mxu0 0.0
      %1514 = vmatprep.subr.mxu0 0.0
      %1515 = vmatpush1.msra.mxu0 0.0
      %1516 = vmatprep.subr.mxu0 0.0
      %1517 = vmatpush1.msra.mxu0 0.0
      %1518 = vmatprep.subr.mxu0 0.0
      %1519 = vmatpush1.msra.mxu0 0.0
      %1520 = vmatprep.mubr.f32.mxu0 0.0
      %1521 = vmatmul.mubr.f32.gmra.mrb[0].mxu0 %v1365
      %v1522 = vpop.f32.mrb[0].mxu0
      %v1523 = vadd.f32 0.0, %v1522
      %v1524 = vpop.f32.mrb[0].mxu0
      %v1525 = vadd.f32 0.0, %v1524
      %1526 = vmatprep.mubr.f32.mxu0 0.0
      %1527 = vmatmul.mubr.f32.gmra.mrb[0].mxu0 %v1368
      %v1528 = vpop.f32.mrb[0].mxu0
      %v1529 = vadd.f32 0.0, %v1528
      %v1530 = vpop.f32.mrb[0].mxu0
      %v1531 = vadd.f32 0.0, %v1530
      %1532 = vmatprep.mubr.f32.mxu0 0.0
      %1533 = vmatmul.mubr.f32.gmra.mrb[0].mxu0 %v1371
      %v1534 = vpop.f32.mrb[0].mxu0
      %v1535 = vadd.f32 0.0, %v1534
      %v1536 = vpop.f32.mrb[0].mxu0
      %v1537 = vadd.f32 0.0, %v1536
      %1538 = vdwg.mxu0
      %v1540 = vsel %vm1363, %v255, 0
      %v1543 = vsel %vm1363, %v256, 0
      %v1546 = vsel %vm1363, %v257, 0
      %1548 = vmatprep.subr.mxu0 %v1362
      %1549 = vmatpush1.msra.mxu0 %v1361
      %1550 = vmatprep.subr.mxu0 %v1356
      %1551 = vmatpush1.msra.mxu0 %v1354
      %1552 = vmatprep.subr.mxu0 0.0
      %1553 = vmatpush1.msra.mxu0 0.0
      %1554 = vmatprep.subr.mxu0 0.0
      %1555 = vmatpush1.msra.mxu0 0.0
      %1556 = vmatprep.subr.mxu0 0.0
      %1557 = vmatpush1.msra.mxu0 0.0
      %1558 = vmatprep.subr.mxu0 0.0
      %1559 = vmatpush1.msra.mxu0 0.0
      %1560 = vmatprep.subr.mxu0 0.0
      %1561 = vmatpush1.msra.mxu0 0.0
      %1562 = vmatprep.subr.mxu0 0.0
      %1563 = vmatpush1.msra.mxu0 0.0
      %1564 = vmatprep.subr.mxu0 0.0
      %1565 = vmatpush1.msra.mxu0 0.0
      %1566 = vmatprep.subr.mxu0 0.0
      %1567 = vmatpush1.msra.mxu0 0.0
      %1568 = vmatprep.subr.mxu0 0.0
      %1569 = vmatpush1.msra.mxu0 0.0
      %1570 = vmatprep.subr.mxu0 0.0
      %1571 = vmatpush1.msra.mxu0 0.0
      %1572 = vmatprep.subr.mxu0 0.0
      %1573 = vmatpush1.msra.mxu0 0.0
      %1574 = vmatprep.subr.mxu0 0.0
      %1575 = vmatpush1.msra.mxu0 0.0
      %1576 = vmatprep.subr.mxu0 0.0
      %1577 = vmatpush1.msra.mxu0 0.0
      %1578 = vmatprep.subr.mxu0 0.0
      %1579 = vmatpush1.msra.mxu0 0.0
      %1580 = vmatprep.subr.mxu0 0.0
      %1581 = vmatpush1.msra.mxu0 0.0
      %1582 = vmatprep.subr.mxu0 0.0
      %1583 = vmatpush1.msra.mxu0 0.0
      %1584 = vmatprep.subr.mxu0 0.0
      %1585 = vmatpush1.msra.mxu0 0.0
      %1586 = vmatprep.subr.mxu0 0.0
      %1587 = vmatpush1.msra.mxu0 0.0
      %1588 = vmatprep.subr.mxu0 0.0
      %1589 = vmatpush1.msra.mxu0 0.0
      %1590 = vmatprep.subr.mxu0 0.0
      %1591 = vmatpush1.msra.mxu0 0.0
      %1592 = vmatprep.subr.mxu0 0.0
      %1593 = vmatpush1.msra.mxu0 0.0
      %1594 = vmatprep.subr.mxu0 0.0
      %1595 = vmatpush1.msra.mxu0 0.0
      %1596 = vmatprep.subr.mxu0 0.0
      %1597 = vmatpush1.msra.mxu0 0.0
      %1598 = vmatprep.subr.mxu0 0.0
      %1599 = vmatpush1.msra.mxu0 0.0
      %1600 = vmatprep.subr.mxu0 0.0
      %1601 = vmatpush1.msra.mxu0 0.0
      %1602 = vmatprep.subr.mxu0 0.0
      %1603 = vmatpush1.msra.mxu0 0.0
      %1604 = vmatprep.subr.mxu0 0.0
      %1605 = vmatpush1.msra.mxu0 0.0
      %1606 = vmatprep.subr.mxu0 0.0
      %1607 = vmatpush1.msra.mxu0 0.0
      %1608 = vmatprep.subr.mxu0 0.0
      %1609 = vmatpush1.msra.mxu0 0.0
      %1610 = vmatprep.subr.mxu0 0.0
      %1611 = vmatpush1.msra.mxu0 0.0
      %1612 = vmatprep.mubr.f32.mxu0 0.0
      %1613 = vmatmul.mubr.f32.gmra.mrb[0].mxu0 %v1540
      %v1614 = vpop.f32.mrb[0].mxu0
      %v1615 = vadd.f32 0.0, %v1614
      %v1616 = vpop.f32.mrb[0].mxu0
      %v1617 = vadd.f32 0.0, %v1616
      %1618 = vmatprep.mubr.f32.mxu0 0.0
      %1619 = vmatmul.mubr.f32.gmra.mrb[0].mxu0 %v1543
      %v1620 = vpop.f32.mrb[0].mxu0
      %v1621 = vadd.f32 0.0, %v1620
      %v1622 = vpop.f32.mrb[0].mxu0
      %v1623 = vadd.f32 0.0, %v1622
      %1624 = vmatprep.mubr.f32.mxu0 0.0
      %1625 = vmatmul.mubr.f32.gmra.mrb[0].mxu0 %v1546
      %v1626 = vpop.f32.mrb[0].mxu0
      %v1627 = vadd.f32 0.0, %v1626
      %v1628 = vpop.f32.mrb[0].mxu0
      %v1629 = vadd.f32 0.0, %v1628
      %1630 = vdwg.mxu0
      %1631 = vrot.lane.b32.xlu0 %v1440, 17
      %v1632 = vpop.permute.xlu0 %1631
      %1633 = vrot.lane.b32.xlu0 %v1442, 17
      %v1634 = vpop.permute.xlu0 %1633
      %1635 = vrot.lane.b32.xlu0 %v1523, 17
      %v1636 = vpop.permute.xlu0 %1635
      %1637 = vrot.lane.b32.xlu0 %v1525, 17
      %v1638 = vpop.permute.xlu0 %1637
      %v1639 = vsel %vm307, %v1636, %v1638
      %v1640 = vsel %vm307, %v1634, %v1636
      %v1641 = vsel %vm307, %v1632, %v1634
      %v1642 = vsel %vm307, %v1638, %v1632
      %v1643 = vld [vmem:[%s4] ss:$8 sm:$0xf]
      %v1645 = vlaneseq
      %v1646 = vshrl.u32 %v1645, 7
      %v1647 = vsub.s32 0, %v1646
      %v1648 = vrot.slane %v1643, %v1647
      %v1649 = vlaneseq
      %v1650 = vshrl.u32 %v1649, 7
      %v1651 = vsub.s32 1, %v1650
      %v1652 = vrot.slane %v1643, %v1651
      %v1653 = vlaneseq
      %v1654 = vshrl.u32 %v1653, 7
      %v1655 = vsub.s32 2, %v1654
      %v1656 = vrot.slane %v1643, %v1655
      %v1657 = vlaneseq
      %v1658 = vshrl.u32 %v1657, 7
      %v1659 = vsub.s32 3, %v1658
      %v1660 = vrot.slane %v1643, %v1659
      %v1665 = vmul.f32 %v1642, %v1648
      %v1666 = vmul.f32 %v1641, %v1652
      %v1667 = vmul.f32 %v1640, %v1656
      %v1668 = vmul.f32 %v1639, %v1660
      %v1669 = vadd.f32 %v1665, 0.0
      %v1670 = vadd.f32 %v1666, 0.0
      %v1671 = vadd.f32 %v1667, 0.0
      %v1672 = vadd.f32 %v1668, 0.0
      %1673 = vrot.lane.b32.xlu0 %v1615, 17
      %v1674 = vpop.permute.xlu0 %1673
      %1675 = vrot.lane.b32.xlu0 %v1617, 17
      %v1676 = vpop.permute.xlu0 %1675
      %v1677 = vsel %vm307, %v1674, %v1676
      %v1678 = vsel %vm307, %v1676, %v1674
      %v1679 = vld [vmem:[%s4] ss:$8 sm:$0x3]
      %v1681 = vlaneseq
      %v1682 = vshrl.u32 %v1681, 7
      %v1683 = vsub.s32 0, %v1682
      %v1684 = vrot.slane %v1679, %v1683
      %v1685 = vlaneseq
      %v1686 = vshrl.u32 %v1685, 7
      %v1687 = vsub.s32 1, %v1686
      %v1688 = vrot.slane %v1679, %v1687
      %v1691 = vmul.f32 %v1678, %v1684
      %v1692 = vmul.f32 %v1677, %v1688
      %v1693 = vadd.f32 %v1691, 0.0
      %v1694 = vadd.f32 %v1692, 0.0
      %v1699 = vrot.slane %v1440, 2
      %v1700 = vrot.slane %v1442, 2
      %v1701 = vrot.slane %v1523, 2
      %v1702 = vrot.slane %v1525, 2
      %1707 = vrot.lane.b32.xlu0 %v1699, 16
      %v1708 = vpop.permute.xlu0 %1707
      %1709 = vrot.lane.b32.xlu0 %v1700, 16
      %v1710 = vpop.permute.xlu0 %1709
      %1711 = vrot.lane.b32.xlu0 %v1701, 16
      %v1712 = vpop.permute.xlu0 %1711
      %1713 = vrot.lane.b32.xlu0 %v1702, 16
      %v1714 = vpop.permute.xlu0 %1713
      %v1715 = vsel %vm424, %v1712, %v1714
      %v1716 = vsel %vm424, %v1710, %v1712
      %v1717 = vsel %vm424, %v1708, %v1710
      %v1718 = vsel %vm424, %v1714, %v1708
      %v1719 = vld [vmem:[%s431] ss:$8 sm:$0xf]
      %v1721 = vlaneseq
      %v1722 = vshrl.u32 %v1721, 7
      %v1723 = vsub.s32 0, %v1722
      %v1724 = vrot.slane %v1719, %v1723
      %v1725 = vlaneseq
      %v1726 = vshrl.u32 %v1725, 7
      %v1727 = vsub.s32 1, %v1726
      %v1728 = vrot.slane %v1719, %v1727
      %v1729 = vlaneseq
      %v1730 = vshrl.u32 %v1729, 7
      %v1731 = vsub.s32 2, %v1730
      %v1732 = vrot.slane %v1719, %v1731
      %v1733 = vlaneseq
      %v1734 = vshrl.u32 %v1733, 7
      %v1735 = vsub.s32 3, %v1734
      %v1736 = vrot.slane %v1719, %v1735
      %v1741 = vmul.f32 %v1718, %v1724
      %v1742 = vmul.f32 %v1717, %v1728
      %v1743 = vmul.f32 %v1716, %v1732
      %v1744 = vmul.f32 %v1715, %v1736
      %v1745 = vadd.f32 %v1669, %v1741
      %v1746 = vadd.f32 %v1670, %v1742
      %v1747 = vadd.f32 %v1671, %v1743
      %v1748 = vadd.f32 %v1672, %v1744
      %v1751 = vrot.slane %v1615, 2
      %v1752 = vrot.slane %v1617, 2
      %1755 = vrot.lane.b32.xlu0 %v1751, 16
      %v1756 = vpop.permute.xlu0 %1755
      %1757 = vrot.lane.b32.xlu0 %v1752, 16
      %v1758 = vpop.permute.xlu0 %1757
      %v1759 = vsel %vm424, %v1756, %v1758
      %v1760 = vsel %vm424, %v1758, %v1756
      %v1761 = vld [vmem:[%s431] ss:$8 sm:$0x3]
      %v1763 = vlaneseq
      %v1764 = vshrl.u32 %v1763, 7
      %v1765 = vsub.s32 0, %v1764
      %v1766 = vrot.slane %v1761, %v1765
      %v1767 = vlaneseq
      %v1768 = vshrl.u32 %v1767, 7
      %v1769 = vsub.s32 1, %v1768
      %v1770 = vrot.slane %v1761, %v1769
      %v1773 = vmul.f32 %v1760, %v1766
      %v1774 = vmul.f32 %v1759, %v1770
      %v1775 = vadd.f32 %v1693, %v1773
      %v1776 = vadd.f32 %v1694, %v1774
      %v1777 = vrot.slane %v1440, 4
      %v1778 = vrot.slane %v1442, 4
      %v1779 = vrot.slane %v1523, 4
      %v1780 = vrot.slane %v1525, 4
      %1785 = vrot.lane.b32.xlu0 %v1777, 15
      %v1786 = vpop.permute.xlu0 %1785
      %1787 = vrot.lane.b32.xlu0 %v1778, 15
      %v1788 = vpop.permute.xlu0 %1787
      %1789 = vrot.lane.b32.xlu0 %v1779, 15
      %v1790 = vpop.permute.xlu0 %1789
      %1791 = vrot.lane.b32.xlu0 %v1780, 15
      %v1792 = vpop.permute.xlu0 %1791
      %v1793 = vsel %vm540, %v1790, %v1792
      %v1794 = vsel %vm540, %v1788, %v1790
      %v1795 = vsel %vm540, %v1786, %v1788
      %v1796 = vsel %vm540, %v1792, %v1786
      %v1797 = vld [vmem:[%s547] ss:$8 sm:$0xf]
      %v1799 = vlaneseq
      %v1800 = vshrl.u32 %v1799, 7
      %v1801 = vsub.s32 0, %v1800
      %v1802 = vrot.slane %v1797, %v1801
      %v1803 = vlaneseq
      %v1804 = vshrl.u32 %v1803, 7
      %v1805 = vsub.s32 1, %v1804
      %v1806 = vrot.slane %v1797, %v1805
      %v1807 = vlaneseq
      %v1808 = vshrl.u32 %v1807, 7
      %v1809 = vsub.s32 2, %v1808
      %v1810 = vrot.slane %v1797, %v1809
      %v1811 = vlaneseq
      %v1812 = vshrl.u32 %v1811, 7
      %v1813 = vsub.s32 3, %v1812
      %v1814 = vrot.slane %v1797, %v1813
      %v1819 = vmul.f32 %v1796, %v1802
      %v1820 = vmul.f32 %v1795, %v1806
      %v1821 = vmul.f32 %v1794, %v1810
      %v1822 = vmul.f32 %v1793, %v1814
      %v1823 = vadd.f32 %v1745, %v1819
      %v1824 = vadd.f32 %v1746, %v1820
      %v1825 = vadd.f32 %v1747, %v1821
      %v1826 = vadd.f32 %v1748, %v1822
      %v1827 = vrot.slane %v1615, 4
      %v1828 = vrot.slane %v1617, 4
      %1831 = vrot.lane.b32.xlu0 %v1827, 15
      %v1832 = vpop.permute.xlu0 %1831
      %1833 = vrot.lane.b32.xlu0 %v1828, 15
      %v1834 = vpop.permute.xlu0 %1833
      %v1835 = vsel %vm540, %v1832, %v1834
      %v1836 = vsel %vm540, %v1834, %v1832
      %v1837 = vld [vmem:[%s547] ss:$8 sm:$0x3]
      %v1839 = vlaneseq
      %v1840 = vshrl.u32 %v1839, 7
      %v1841 = vsub.s32 0, %v1840
      %v1842 = vrot.slane %v1837, %v1841
      %v1843 = vlaneseq
      %v1844 = vshrl.u32 %v1843, 7
      %v1845 = vsub.s32 1, %v1844
      %v1846 = vrot.slane %v1837, %v1845
      %v1849 = vmul.f32 %v1836, %v1842
      %v1850 = vmul.f32 %v1835, %v1846
      %v1851 = vadd.f32 %v1775, %v1849
      %v1852 = vadd.f32 %v1776, %v1850
      %v1853 = vrot.slane %v1440, 6
      %v1854 = vrot.slane %v1442, 6
      %v1855 = vrot.slane %v1523, 6
      %v1856 = vrot.slane %v1525, 6
      %1861 = vrot.lane.b32.xlu0 %v1853, 1
      %v1862 = vpop.permute.xlu0 %1861
      %1863 = vrot.lane.b32.xlu0 %v1854, 1
      %v1864 = vpop.permute.xlu0 %1863
      %1865 = vrot.lane.b32.xlu0 %v1855, 1
      %v1866 = vpop.permute.xlu0 %1865
      %1867 = vrot.lane.b32.xlu0 %v1856, 1
      %v1868 = vpop.permute.xlu0 %1867
      %v1869 = vsel %vm656, %v1866, %v1868
      %v1870 = vsel %vm656, %v1864, %v1866
      %v1871 = vsel %vm656, %v1862, %v1864
      %v1872 = vsel %vm656, %v1868, %v1862
      %v1873 = vld [vmem:[%s663] ss:$8 sm:$0xf]
      %v1875 = vlaneseq
      %v1876 = vshrl.u32 %v1875, 7
      %v1877 = vsub.s32 0, %v1876
      %v1878 = vrot.slane %v1873, %v1877
      %v1879 = vlaneseq
      %v1880 = vshrl.u32 %v1879, 7
      %v1881 = vsub.s32 1, %v1880
      %v1882 = vrot.slane %v1873, %v1881
      %v1883 = vlaneseq
      %v1884 = vshrl.u32 %v1883, 7
      %v1885 = vsub.s32 2, %v1884
      %v1886 = vrot.slane %v1873, %v1885
      %v1887 = vlaneseq
      %v1888 = vshrl.u32 %v1887, 7
      %v1889 = vsub.s32 3, %v1888
      %v1890 = vrot.slane %v1873, %v1889
      %v1895 = vmul.f32 %v1872, %v1878
      %v1896 = vmul.f32 %v1871, %v1882
      %v1897 = vmul.f32 %v1870, %v1886
      %v1898 = vmul.f32 %v1869, %v1890
      %v1899 = vadd.f32 %v1823, %v1895
      %v1900 = vadd.f32 %v1824, %v1896
      %v1901 = vadd.f32 %v1825, %v1897
      %v1902 = vadd.f32 %v1826, %v1898
      %v1903 = vrot.slane %v1615, 6
      %v1904 = vrot.slane %v1617, 6
      %1907 = vrot.lane.b32.xlu0 %v1903, 1
      %v1908 = vpop.permute.xlu0 %1907
      %1909 = vrot.lane.b32.xlu0 %v1904, 1
      %v1910 = vpop.permute.xlu0 %1909
      %v1911 = vsel %vm656, %v1908, %v1910
      %v1912 = vsel %vm656, %v1910, %v1908
      %v1913 = vld [vmem:[%s663] ss:$8 sm:$0x3]
      %v1915 = vlaneseq
      %v1916 = vshrl.u32 %v1915, 7
      %v1917 = vsub.s32 0, %v1916
      %v1918 = vrot.slane %v1913, %v1917
      %v1919 = vlaneseq
      %v1920 = vshrl.u32 %v1919, 7
      %v1921 = vsub.s32 1, %v1920
      %v1922 = vrot.slane %v1913, %v1921
      %v1925 = vmul.f32 %v1912, %v1918
      %v1926 = vmul.f32 %v1911, %v1922
      %v1927 = vadd.f32 %v1851, %v1925
      %v1928 = vadd.f32 %v1852, %v1926
      %v1929 = vadd.f32 %v1899, %v1446
      %v1930 = vadd.f32 %v1900, %v1448
      %v1931 = vadd.f32 %v1901, %v1529
      %v1932 = vadd.f32 %v1902, %v1531
      %v1933 = vadd.f32 %v1927, %v1621
      %v1934 = vadd.f32 %v1928, %v1623
      %v1939 = vrot.slane %v1446, 2
      %v1940 = vrot.slane %v1448, 2
      %v1941 = vrot.slane %v1529, 2
      %v1942 = vrot.slane %v1531, 2
      %1947 = vrot.lane.b32.xlu0 %v1939, 127
      %v1948 = vpop.permute.xlu0 %1947
      %1949 = vrot.lane.b32.xlu0 %v1940, 127
      %v1950 = vpop.permute.xlu0 %1949
      %1951 = vrot.lane.b32.xlu0 %v1941, 127
      %v1952 = vpop.permute.xlu0 %1951
      %1953 = vrot.lane.b32.xlu0 %v1942, 127
      %v1954 = vpop.permute.xlu0 %1953
      %v1955 = vsel %vm804, %v1952, %v1954
      %v1956 = vsel %vm804, %v1950, %v1952
      %v1957 = vsel %vm804, %v1948, %v1950
      %v1958 = vsel %vm804, %v1954, %v1948
      %v1959 = vld [vmem:[%s811] ss:$8 sm:$0xf]
      %v1961 = vlaneseq
      %v1962 = vshrl.u32 %v1961, 7
      %v1963 = vsub.s32 0, %v1962
      %v1964 = vrot.slane %v1959, %v1963
      %v1965 = vlaneseq
      %v1966 = vshrl.u32 %v1965, 7
      %v1967 = vsub.s32 1, %v1966
      %v1968 = vrot.slane %v1959, %v1967
      %v1969 = vlaneseq
      %v1970 = vshrl.u32 %v1969, 7
      %v1971 = vsub.s32 2, %v1970
      %v1972 = vrot.slane %v1959, %v1971
      %v1973 = vlaneseq
      %v1974 = vshrl.u32 %v1973, 7
      %v1975 = vsub.s32 3, %v1974
      %v1976 = vrot.slane %v1959, %v1975
      %v1981 = vmul.f32 %v1957, %v1964
      %v1982 = vmul.f32 %v1956, %v1968
      %v1983 = vmul.f32 %v1955, %v1972
      %v1984 = vmul.f32 %v1958, %v1976
      %v1985 = vadd.f32 %v1929, %v1981
      %v1986 = vadd.f32 %v1930, %v1982
      %v1987 = vadd.f32 %v1931, %v1983
      %v1988 = vadd.f32 %v1932, %v1984
      %v1991 = vrot.slane %v1621, 2
      %v1992 = vrot.slane %v1623, 2
      %1995 = vrot.lane.b32.xlu0 %v1991, 127
      %v1996 = vpop.permute.xlu0 %1995
      %1997 = vrot.lane.b32.xlu0 %v1992, 127
      %v1998 = vpop.permute.xlu0 %1997
      %v1999 = vsel %vm804, %v1996, %v1998
      %v2000 = vsel %vm804, %v1998, %v1996
      %v2001 = vld [vmem:[%s811] ss:$8 sm:$0x3]
      %v2003 = vlaneseq
      %v2004 = vshrl.u32 %v2003, 7
      %v2005 = vsub.s32 0, %v2004
      %v2006 = vrot.slane %v2001, %v2005
      %v2007 = vlaneseq
      %v2008 = vshrl.u32 %v2007, 7
      %v2009 = vsub.s32 1, %v2008
      %v2010 = vrot.slane %v2001, %v2009
      %v2013 = vmul.f32 %v1999, %v2006
      %v2014 = vmul.f32 %v2000, %v2010
      %v2015 = vadd.f32 %v1933, %v2013
      %v2016 = vadd.f32 %v1934, %v2014
      %v2017 = vrot.slane %v1446, 4
      %v2018 = vrot.slane %v1448, 4
      %v2019 = vrot.slane %v1529, 4
      %v2020 = vrot.slane %v1531, 4
      %2025 = vrot.lane.b32.xlu0 %v2017, 113
      %v2026 = vpop.permute.xlu0 %2025
      %2027 = vrot.lane.b32.xlu0 %v2018, 113
      %v2028 = vpop.permute.xlu0 %2027
      %2029 = vrot.lane.b32.xlu0 %v2019, 113
      %v2030 = vpop.permute.xlu0 %2029
      %2031 = vrot.lane.b32.xlu0 %v2020, 113
      %v2032 = vpop.permute.xlu0 %2031
      %v2033 = vsel %vm920, %v2030, %v2032
      %v2034 = vsel %vm920, %v2028, %v2030
      %v2035 = vsel %vm920, %v2026, %v2028
      %v2036 = vsel %vm920, %v2032, %v2026
      %v2037 = vld [vmem:[%s927] ss:$8 sm:$0xf]
      %v2039 = vlaneseq
      %v2040 = vshrl.u32 %v2039, 7
      %v2041 = vsub.s32 0, %v2040
      %v2042 = vrot.slane %v2037, %v2041
      %v2043 = vlaneseq
      %v2044 = vshrl.u32 %v2043, 7
      %v2045 = vsub.s32 1, %v2044
      %v2046 = vrot.slane %v2037, %v2045
      %v2047 = vlaneseq
      %v2048 = vshrl.u32 %v2047, 7
      %v2049 = vsub.s32 2, %v2048
      %v2050 = vrot.slane %v2037, %v2049
      %v2051 = vlaneseq
      %v2052 = vshrl.u32 %v2051, 7
      %v2053 = vsub.s32 3, %v2052
      %v2054 = vrot.slane %v2037, %v2053
      %v2059 = vmul.f32 %v2035, %v2042
      %v2060 = vmul.f32 %v2034, %v2046
      %v2061 = vmul.f32 %v2033, %v2050
      %v2062 = vmul.f32 %v2036, %v2054
      %v2063 = vadd.f32 %v1985, %v2059
      %v2064 = vadd.f32 %v1986, %v2060
      %v2065 = vadd.f32 %v1987, %v2061
      %v2066 = vadd.f32 %v1988, %v2062
      %v2067 = vrot.slane %v1621, 4
      %v2068 = vrot.slane %v1623, 4
      %2071 = vrot.lane.b32.xlu0 %v2067, 113
      %v2072 = vpop.permute.xlu0 %2071
      %2073 = vrot.lane.b32.xlu0 %v2068, 113
      %v2074 = vpop.permute.xlu0 %2073
      %v2075 = vsel %vm920, %v2072, %v2074
      %v2076 = vsel %vm920, %v2074, %v2072
      %v2077 = vld [vmem:[%s927] ss:$8 sm:$0x3]
      %v2079 = vlaneseq
      %v2080 = vshrl.u32 %v2079, 7
      %v2081 = vsub.s32 0, %v2080
      %v2082 = vrot.slane %v2077, %v2081
      %v2083 = vlaneseq
      %v2084 = vshrl.u32 %v2083, 7
      %v2085 = vsub.s32 1, %v2084
      %v2086 = vrot.slane %v2077, %v2085
      %v2089 = vmul.f32 %v2075, %v2082
      %v2090 = vmul.f32 %v2076, %v2086
      %v2091 = vadd.f32 %v2015, %v2089
      %v2092 = vadd.f32 %v2016, %v2090
      %v2093 = vrot.slane %v1446, 6
      %v2094 = vrot.slane %v1448, 6
      %v2095 = vrot.slane %v1529, 6
      %v2096 = vrot.slane %v1531, 6
      %2101 = vrot.lane.b32.xlu0 %v2093, 112
      %v2102 = vpop.permute.xlu0 %2101
      %2103 = vrot.lane.b32.xlu0 %v2094, 112
      %v2104 = vpop.permute.xlu0 %2103
      %2105 = vrot.lane.b32.xlu0 %v2095, 112
      %v2106 = vpop.permute.xlu0 %2105
      %2107 = vrot.lane.b32.xlu0 %v2096, 112
      %v2108 = vpop.permute.xlu0 %2107
      %v2109 = vsel %vm1036, %v2106, %v2108
      %v2110 = vsel %vm1036, %v2104, %v2106
      %v2111 = vsel %vm1036, %v2102, %v2104
      %v2112 = vsel %vm1036, %v2108, %v2102
      %v2113 = vld [vmem:[%s1043] ss:$8 sm:$0xf]
      %v2115 = vlaneseq
      %v2116 = vshrl.u32 %v2115, 7
      %v2117 = vsub.s32 0, %v2116
      %v2118 = vrot.slane %v2113, %v2117
      %v2119 = vlaneseq
      %v2120 = vshrl.u32 %v2119, 7
      %v2121 = vsub.s32 1, %v2120
      %v2122 = vrot.slane %v2113, %v2121
      %v2123 = vlaneseq
      %v2124 = vshrl.u32 %v2123, 7
      %v2125 = vsub.s32 2, %v2124
      %v2126 = vrot.slane %v2113, %v2125
      %v2127 = vlaneseq
      %v2128 = vshrl.u32 %v2127, 7
      %v2129 = vsub.s32 3, %v2128
      %v2130 = vrot.slane %v2113, %v2129
      %v2135 = vmul.f32 %v2111, %v2118
      %v2136 = vmul.f32 %v2110, %v2122
      %v2137 = vmul.f32 %v2109, %v2126
      %v2138 = vmul.f32 %v2112, %v2130
      %v2139 = vadd.f32 %v2063, %v2135
      %v2140 = vadd.f32 %v2064, %v2136
      %v2141 = vadd.f32 %v2065, %v2137
      %v2142 = vadd.f32 %v2066, %v2138
      %v2143 = vrot.slane %v1621, 6
      %v2144 = vrot.slane %v1623, 6
      %2147 = vrot.lane.b32.xlu0 %v2143, 112
      %v2148 = vpop.permute.xlu0 %2147
      %2149 = vrot.lane.b32.xlu0 %v2144, 112
      %v2150 = vpop.permute.xlu0 %2149
      %v2151 = vsel %vm1036, %v2148, %v2150
      %v2152 = vsel %vm1036, %v2150, %v2148
      %v2153 = vld [vmem:[%s1043] ss:$8 sm:$0x3]
      %v2155 = vlaneseq
      %v2156 = vshrl.u32 %v2155, 7
      %v2157 = vsub.s32 0, %v2156
      %v2158 = vrot.slane %v2153, %v2157
      %v2159 = vlaneseq
      %v2160 = vshrl.u32 %v2159, 7
      %v2161 = vsub.s32 1, %v2160
      %v2162 = vrot.slane %v2153, %v2161
      %v2165 = vmul.f32 %v2151, %v2158
      %v2166 = vmul.f32 %v2152, %v2162
      %v2167 = vadd.f32 %v2091, %v2165
      %v2168 = vadd.f32 %v2092, %v2166
      %2169 = vrot.lane.b32.xlu0 %v1452, 111
      %v2170 = vpop.permute.xlu0 %2169
      %2171 = vrot.lane.b32.xlu0 %v1454, 111
      %v2172 = vpop.permute.xlu0 %2171
      %2173 = vrot.lane.b32.xlu0 %v1535, 111
      %v2174 = vpop.permute.xlu0 %2173
      %2175 = vrot.lane.b32.xlu0 %v1537, 111
      %v2176 = vpop.permute.xlu0 %2175
      %v2177 = vsel %vm1152, %v2174, %v2176
      %v2178 = vsel %vm1152, %v2172, %v2174
      %v2179 = vsel %vm1152, %v2170, %v2172
      %v2180 = vsel %vm1152, %v2176, %v2170
      %v2181 = vld [vmem:[%s1159] ss:$8 sm:$0xf]
      %v2183 = vlaneseq
      %v2184 = vshrl.u32 %v2183, 7
      %v2185 = vsub.s32 0, %v2184
      %v2186 = vrot.slane %v2181, %v2185
      %v2187 = vlaneseq
      %v2188 = vshrl.u32 %v2187, 7
      %v2189 = vsub.s32 1, %v2188
      %v2190 = vrot.slane %v2181, %v2189
      %v2191 = vlaneseq
      %v2192 = vshrl.u32 %v2191, 7
      %v2193 = vsub.s32 2, %v2192
      %v2194 = vrot.slane %v2181, %v2193
      %v2195 = vlaneseq
      %v2196 = vshrl.u32 %v2195, 7
      %v2197 = vsub.s32 3, %v2196
      %v2198 = vrot.slane %v2181, %v2197
      %v2203 = vmul.f32 %v2179, %v2186
      %v2204 = vmul.f32 %v2178, %v2190
      %v2205 = vmul.f32 %v2177, %v2194
      %v2206 = vmul.f32 %v2180, %v2198
      %v2207 = vadd.f32 %v2139, %v2203
      %v2208 = vadd.f32 %v2140, %v2204
      %v2209 = vadd.f32 %v2141, %v2205
      %v2210 = vadd.f32 %v2142, %v2206
      %2211 = vrot.lane.b32.xlu0 %v1627, 111
      %v2212 = vpop.permute.xlu0 %2211
      %2213 = vrot.lane.b32.xlu0 %v1629, 111
      %v2214 = vpop.permute.xlu0 %2213
      %v2215 = vsel %vm1152, %v2212, %v2214
      %v2216 = vsel %vm1152, %v2214, %v2212
      %v2217 = vld [vmem:[%s1159] ss:$8 sm:$0x3]
      %v2219 = vlaneseq
      %v2220 = vshrl.u32 %v2219, 7
      %v2221 = vsub.s32 0, %v2220
      %v2222 = vrot.slane %v2217, %v2221
      %v2223 = vlaneseq
      %v2224 = vshrl.u32 %v2223, 7
      %v2225 = vsub.s32 1, %v2224
      %v2226 = vrot.slane %v2217, %v2225
      %v2229 = vmul.f32 %v2215, %v2222
      %v2230 = vmul.f32 %v2216, %v2226
      %v2231 = vadd.f32 %v2167, %v2229
      %v2232 = vadd.f32 %v2168, %v2230
      %2234 = vset.pattern.permute.xlu0 3
      %2235 = vperm.xlu0 %2234, %v261
      %v2236 = vpop.permute.xlu0 %2235
      %v2238 = vadd.f32 %v2231, %v2236
      %v2239 = vadd.f32 %v2232, %v2236
      %v2240 = vadd.f32 %v2207, %v2238
      %v2241 = vadd.f32 %v2208, %v2239
      %v2242 = vadd.f32 %v2209, %v2238
      %v2243 = vadd.f32 %v2210, %v2239
      %v2244 = vxor.u32 %v2240, 2147483648
      %v2245 = vxor.u32 %v2241, 2147483648
      %v2246 = vxor.u32 %v2242, 2147483648
      %v2247 = vxor.u32 %v2243, 2147483648
      %v2248 = vmul.f32 %v2244, 1.442695
      %v2249 = vpow.pop %v2248
      %v2250 = vmul.f32 %v2245, 1.442695
      %v2251 = vpow.pop %v2250
      %v2252 = vmul.f32 %v2246, 1.442695
      %v2253 = vpow.pop %v2252
      %v2254 = vmul.f32 %v2247, 1.442695
      %v2255 = vpow.pop %v2254
      %v2256 = vadd.f32 %v2249, 1.0
      %v2257 = vadd.f32 %v2251, 1.0
      %v2258 = vadd.f32 %v2253, 1.0
      %v2259 = vadd.f32 %v2255, 1.0
      %v2260 = vrcp.pop %v2256
      %v2261 = vmul.f32 1.0, %v2260
      %v2262 = vrcp.pop %v2257
      %v2263 = vmul.f32 1.0, %v2262
      %v2264 = vrcp.pop %v2258
      %v2265 = vmul.f32 1.0, %v2264
      %v2266 = vrcp.pop %v2259
      %v2267 = vmul.f32 1.0, %v2266
      %v2268 = vlaneseq
      %v2269 = vshrl.u32 %v2268, 7
      %v2270 = vsub.s32 0, %v2269
      %v2271 = vrot.slane %v2261, %v2270
      %v2272 = vlaneseq
      %v2273 = vshrl.u32 %v2272, 7
      %v2274 = vsub.s32 0, %v2273
      %v2275 = vrot.slane %v2263, %v2274
      %v2276 = vlaneseq
      %v2277 = vshrl.u32 %v2276, 7
      %v2278 = vsub.s32 0, %v2277
      %v2279 = vrot.slane %v2265, %v2278
      %v2280 = vlaneseq
      %v2281 = vshrl.u32 %v2280, 7
      %v2282 = vsub.s32 0, %v2281
      %v2283 = vrot.slane %v2267, %v2282
      %v2284 = vmul.f32 %v2271, %v1343
      %v2285 = vmul.f32 %v2275, %v1344
      %v2286 = vmul.f32 %v2279, %v1345
      %v2287 = vmul.f32 %v2283, %v1346
      %v2288 = vmul.f32 %v2271, %v1328
      %v2289 = vmul.f32 %v2275, %v1330
      %v2290 = vmul.f32 %v2279, %v1332
      %v2291 = vmul.f32 %v2283, %v1334
      %2292 = vset.pattern.permute.xlu0 1
      %2293 = vperm.xlu0 %2292, %v258
      %v2294 = vpop.permute.xlu0 %2293
      %2297 = vset.pattern.permute.xlu0 1
      %2298 = vperm.xlu0 %2297, %v260
      %v2299 = vpop.permute.xlu0 %2298
      %v2301 = vmul.f32 %v2284, %v2294
      %v2302 = vmul.f32 %v2285, %v2294
      %v2303 = vmul.f32 %v2286, %v2294
      %v2304 = vmul.f32 %v2287, %v2294
      %v2305 = vmul.f32 %v2288, %v2299
      %v2306 = vmul.f32 %v2289, %v2299
      %v2307 = vmul.f32 %v2290, %v2299
      %v2308 = vmul.f32 %v2291, %v2299
      %v2309 = vlaneseq
      %v2310 = vshrl.u32 %v2309, 7
      %v2311 = vsub.s32 1, %v2310
      %v2312 = vrot.slane %v2261, %v2311
      %v2313 = vlaneseq
      %v2314 = vshrl.u32 %v2313, 7
      %v2315 = vsub.s32 1, %v2314
      %v2316 = vrot.slane %v2263, %v2315
      %v2317 = vlaneseq
      %v2318 = vshrl.u32 %v2317, 7
      %v2319 = vsub.s32 1, %v2318
      %v2320 = vrot.slane %v2265, %v2319
      %v2321 = vlaneseq
      %v2322 = vshrl.u32 %v2321, 7
      %v2323 = vsub.s32 1, %v2322
      %v2324 = vrot.slane %v2267, %v2323
      %v2325 = vmul.f32 %v2312, %v1361
      %v2326 = vmul.f32 %v2316, %v1362
      %v2327 = vmul.f32 %v2320, %v1361
      %v2328 = vmul.f32 %v2324, %v1362
      %v2329 = vmul.f32 %v2312, %v1354
      %v2330 = vmul.f32 %v2316, %v1356
      %v2331 = vmul.f32 %v2320, %v1354
      %v2332 = vmul.f32 %v2324, %v1356
      %2333 = vset.pattern.permute.xlu0 2
      %2334 = vperm.xlu0 %2333, %v258
      %v2335 = vpop.permute.xlu0 %2334
      %2337 = vset.pattern.permute.xlu0 2
      %2338 = vperm.xlu0 %2337, %v260
      %v2339 = vpop.permute.xlu0 %2338
      %v2341 = vmul.f32 %v2325, %v2335
      %v2342 = vmul.f32 %v2326, %v2335
      %v2343 = vmul.f32 %v2327, %v2335
      %v2344 = vmul.f32 %v2328, %v2335
      %v2345 = vmul.f32 %v2329, %v2339
      %v2346 = vmul.f32 %v2330, %v2339
      %v2347 = vmul.f32 %v2331, %v2339
      %v2348 = vmul.f32 %v2332, %v2339
      %v2349 = vadd.f32 %v2301, %v2341
      %v2350 = vadd.f32 %v2302, %v2342
      %v2351 = vadd.f32 %v2303, %v2343
      %v2352 = vadd.f32 %v2304, %v2344
      %v2353 = vadd.f32 %v2305, %v2345
      %v2354 = vadd.f32 %v2306, %v2346
      %v2355 = vadd.f32 %v2307, %v2347
      %v2356 = vadd.f32 %v2308, %v2348
      %2357 = vst [vmem:[%s248] sm:$0xff] %v2349
      %2358 = vst [vmem:[%s248 + $0x8] sm:$0xff] %v2350
      %2359 = vst [vmem:[%s248 + $0x10] sm:$0xff] %v2353
      %2360 = vst [vmem:[%s248 + $0x18] sm:$0xff] %v2354
      %2361 = vst [vmem:[%s248 + $0x20] sm:$0xff] %v2351
      %2362 = vst [vmem:[%s248 + $0x28] sm:$0xff] %v2352
      %2363 = vst [vmem:[%s248 + $0x30] sm:$0xff] %v2355
      %2364 = vst [vmem:[%s248 + $0x38] sm:$0xff] %v2356
      %2365 = vst [vmem:[%s248 + $0x40] sm:$0xff] %v1361
      %2366 = vst [vmem:[%s248 + $0x48] sm:$0xff] %v1362
      %2367 = vst [vmem:[%s248 + $0x50] sm:$0xff] %v1354
      %2368 = vst [vmem:[%s248 + $0x58] sm:$0xff] %v1356
      %p2369 = scmp.lt.s32.totalorder %s17, 1
      %s2370 = scalar_select %p2369, %s17, 1
      %s2371 = smul.addr %s2370, 12
      %s2372 = smul.addr %s2371, 8
      %s2373 = scalar_lea.vmem %s6, %s2372
      // Predicated region
      $region45: #{net_forward.1} parent=43 // pred_check
        %p2374 = pneg %p166
      $region46: #{net_forward.1} parent=43 // pred_check_branch
        %2376 = sbr.rel (%p2374) target = $region48
      $region47: #{net_forward.1} parent=43 // pred_region
        _
      $region48: #{net_forward.1} parent=43 // pred_fallthru
        _
    $region44: #{net_forward.1} parent=5 // pred_fallthru
      _
    %p2377 = scmp.le.s32.totalorder 2, %s12
    // Predicated region
    $region49: #{net_forward.1} parent=5 // pred_check
      %p2378 = pneg %p2377
    $region50: #{net_forward.1} parent=5 // pred_check_branch
      %2380 = sbr.rel (%p2378) target = $region52
    $region51: #{net_forward.1} parent=5 // pred_region
      %s2381 = ssub.s32 %s12, 2
      // Predicated region
      $region53: #{net_forward.1} parent=51 // pred_check
        %p2382 = pneg %p172
      $region54: #{net_forward.1} parent=51 // pred_check_branch
        %2384 = sbr.rel (%p2382) target = $region56
      $region55: #{net_forward.1} parent=51 // pred_region
        %p2385 = scmp.lt.s32.totalorder %s18, 1
        %s2386 = scalar_select %p2385, %s18, 1
        %s2387 = smul.addr %s2386, 12
        %s2388 = smul.addr %s2387, 8
        %s2389 = scalar_lea.vmem %s6, %s2388
      $region56: #{net_forward.1} parent=51 // pred_fallthru
        _
    $region52: #{net_forward.1} parent=5 // pred_fallthru
      _
  $region6: #{net_forward.1} parent=0 // loop_footer
    %s16 = sadd.s32 1, %s12
  $region7: #{net_forward.1} parent=0 // loop_footer_branch
    %11 = sbr.rel target = $region3
  $region8: #{net_forward.1} parent=0 // loop_exit
    _

</llo_original>
